<compile_context>
chip_gen: v7x
topology: tpu7x:2x2x1
jax: 0.10.0
libtpu: 0.0.40
codegen_flags: <defaults>
</compile_context>

<pallas_src>
import jax
import jax.numpy as jnp
from jax.experimental import pallas as pl
from jax.experimental.pallas import tpu as pltpu


def _vmem_spec():
    return pl.BlockSpec(memory_space=pltpu.MemorySpace.VMEM)


# ------------------------- fused forward-pass kernel -------------------------
def _make_fused_kernel(n_layers, qpad):
    def kernel(*refs):
        a_ref, x_ref, idx_ref = refs[:3]
        layer_refs = refs[3:3 + 2 * n_layers]
        o_ref = refs[3 + 2 * n_layers]

        a = a_ref[...]          # (N, N) bf16 row-normalized mean-aggregation matrix
        x = x_ref[...]          # (N, D0) f32 embedded node features
        n = a.shape[0]

        for i in range(n_layers):
            w = layer_refs[2 * i][...]       # (Din, 2*Dout) bf16 == [Wl | Wr]
            b = layer_refs[2 * i + 1][...]   # (1, Dout) f32
            din, dout = w.shape[0], b.shape[1]
            xb = x.astype(jnp.bfloat16)      # cast operands right before the dots
            if din <= dout:
                # Aggregate-first: the O(N^2) matmul runs over Din (<= Dout) cols.
                agg = jnp.dot(a, xb, preferred_element_type=jnp.float32)
                out = (jnp.dot(agg.astype(jnp.bfloat16), w[:, :dout],
                               preferred_element_type=jnp.float32)
                       + jnp.dot(xb, w[:, dout:],
                                 preferred_element_type=jnp.float32)
                       + b)
            else:
                # Re-associated: one fused dense matmul (K=Din, width 2*Dout),
                # then the O(N^2) adjacency matmul over only Dout columns.
                p = jnp.dot(xb, w, preferred_element_type=jnp.float32)  # (N, 2*Dout)
                out = (jnp.dot(a, p[:, :dout].astype(jnp.bfloat16),
                               preferred_element_type=jnp.float32)
                       + p[:, dout:] + b)
            if i < n_layers - 1:
                out = jnp.maximum(out, 0.0)   # ReLU between layers only (f32)
            x = out

        # ------------------------- fused decode -------------------------
        # Build stacked [src; dst] one-hot selection in-kernel (no HBM one-hots):
        # sel[r, j] = (j == idx[r]); padded rows carry -1 and stay all-zero.
        idx = idx_ref[...]                                    # (2*Qpad, 1) int32
        sel = (jax.lax.broadcasted_iota(jnp.int32, (2 * qpad, n), 1) == idx
               ).astype(jnp.bfloat16)
        # Single gather matmul against the VMEM-resident z, then split.
        zsd = jnp.dot(sel, x.astype(jnp.bfloat16),
                      preferred_element_type=jnp.float32)     # (2*Qpad, D)
        m = zsd[:qpad] * zsd[qpad:]                           # (Qpad, D) f32
        # scores[q] = sum_d m[q, d]; emit lane-dense (8, Qpad) identical rows via
        # a trans_b matmul: ones(8, D) @ m^T  -> full unmasked vst.
        ones = jnp.ones((o_ref.shape[0], m.shape[1]), jnp.float32)
        o_ref[...] = jax.lax.dot_general(
            ones, m, dimension_numbers=(((1,), (1,)), ((), ())),
            preferred_element_type=jnp.float32)

    return kernel


# ----------------------------- parameter setup ------------------------------
def make_dims(node_dim, hidden_dim, output_dim, total_layer_number=4):
    # Mirrors SAGE_EP.__init__ dim schedule exactly.
    dims = [node_dim]
    layer_number = total_layer_number - 1
    middle_dim = 2 * hidden_dim
    step_up = (middle_dim - node_dim) // (layer_number // 2)
    for _ in range(layer_number // 2):
        dims.append(dims[-1] + step_up)
    step_down = (middle_dim - hidden_dim) // (layer_number - layer_number // 2)
    for _ in range(layer_number // 2, layer_number):
        dims.append(dims[-1] - step_down)
    dims.append(output_dim)
    return dims


def init_params(key, node_dict_size, node_dim, hidden_dim, output_dim,
                total_layer_number=4):
    dims = make_dims(node_dim, hidden_dim, output_dim, total_layer_number)
    keys = jax.random.split(key, 1 + 3 * total_layer_number)
    # nn.init.normal_(embedding.weight, mean=0, std=node_dim ** -0.5)
    emb = jax.random.normal(keys[0], (node_dict_size, node_dim),
                            jnp.float32) * (node_dim ** -0.5)
    layers = []
    ki = 1
    for i in range(total_layer_number):
        din, dout = dims[i], dims[i + 1]
        scale = float(din) ** -0.5
        wl = jax.random.uniform(keys[ki], (din, dout), jnp.float32, -scale, scale)
        ki += 1
        wr = jax.random.uniform(keys[ki], (din, dout), jnp.float32, -scale, scale)
        ki += 1
        b = jax.random.uniform(keys[ki], (1, dout), jnp.float32, -scale, scale)
        ki += 1
        layers.append((wl, wr, b))
    return emb, layers, dims


# ------------------------------- graph glue ---------------------------------
def build_mean_adj(edge_index, num_nodes):
    # A[i, j] = 1/deg_in(i) for each message j -> i (PyG mean aggregation;
    # duplicate edges counted, isolated nodes get a zero row).
    src, dst = edge_index[0], edge_index[1]
    a = jnp.zeros((num_nodes, num_nodes), jnp.float32).at[dst, src].add(1.0)
    deg = a.sum(axis=1, keepdims=True)
    return jnp.where(deg > 0, a / jnp.maximum(deg, 1.0), 0.0)


# --------------------------------- forward ----------------------------------
def sage_ep_forward(emb, layers, node_ids, edge_index, edge_label_index):
    # embedding lookup (== Embedding(x).squeeze(1)); dropout is identity in eval.
    x = emb[node_ids.reshape(-1)]
    n = x.shape[0]
    a = build_mean_adj(edge_index, n).astype(jnp.bfloat16)  # bf16 halves DMA+VMEM

    q = edge_label_index.shape[1]
    qpad = max(128, ((q + 127) // 128) * 128)   # lane-dense score output
    pad = jnp.full((qpad - q,), -1, jnp.int32)  # -1 never matches a node id
    idx_all = jnp.concatenate(
        [edge_label_index[0].astype(jnp.int32), pad,
         edge_label_index[1].astype(jnp.int32), pad]).reshape(2 * qpad, 1)

    inputs = [a, x, idx_all]
    flops = 0
    for wl, wr, b in layers:
        din, dout = wl.shape
        inputs.append(jnp.concatenate([wl, wr], axis=1).astype(jnp.bfloat16))
        inputs.append(b)
        if din <= dout:
            flops += 2 * n * n * din + 2 * n * din * (2 * dout)
        else:
            flops += 2 * n * din * (2 * dout) + 2 * n * n * dout
    d_last = layers[-1][2].shape[1]
    flops += 2 * (2 * qpad) * n * d_last + 2 * 8 * qpad * d_last

    in_bytes = sum(int(v.size) * v.dtype.itemsize for v in inputs)
    out_bytes = 8 * qpad * 4
    # Explicit VMEM budget: inputs + intermediates + headroom, capped at v7x's
    # 64 MiB physical so the same config is valid across v5e/v6e/v7x.
    vmem_limit = int(min(max(4 * in_bytes + (8 << 20), 32 << 20), 64 << 20))

    out = pl.pallas_call(
        _make_fused_kernel(len(layers), qpad),
        out_shape=jax.ShapeDtypeStruct((8, qpad), jnp.float32),
        in_specs=[_vmem_spec()] * len(inputs),
        out_specs=_vmem_spec(),
        compiler_params=pltpu.CompilerParams(vmem_limit_bytes=vmem_limit),
        cost_estimate=pl.CostEstimate(flops=int(flops), transcendentals=0,
                                      bytes_accessed=int(in_bytes + out_bytes)),
    )(*inputs)
    return out[0, :q]


# ----------------------------- pure-JAX references ---------------------------
def sage_ep_reference_f32(emb, layers, node_ids, edge_index, edge_label_index):
    # Exact module semantics, all-f32.
    x = emb[node_ids.reshape(-1)]
    a = build_mean_adj(edge_index, x.shape[0])
    for i, (wl, wr, b) in enumerate(layers):
        x = (a @ x) @ wl + x @ wr + b
        if i < len(layers) - 1:
            x = jnp.maximum(x, 0.0)
    zs = x[edge_label_index[0]]
    zd = x[edge_label_index[1]]
    return jnp.sum(zs * zd, axis=-1)


def sage_ep_reference_mixed(emb, layers, node_ids, edge_index, edge_label_index):
    # Mirrors the kernel's mixed-precision math (bf16 matmul inputs, f32 accum,
    # f32 elementwise) to verify the kernel implementation tightly.
    x = emb[node_ids.reshape(-1)]
    a = build_mean_adj(edge_index, x.shape[0]).astype(jnp.bfloat16)
    for i, (wl, wr, b) in enumerate(layers):
        w = jnp.concatenate([wl, wr], axis=1).astype(jnp.bfloat16)
        din, dout = wl.shape
        xb = x.astype(jnp.bfloat16)
        if din <= dout:
            agg = jnp.dot(a, xb, preferred_element_type=jnp.float32)
            out = (jnp.dot(agg.astype(jnp.bfloat16), w[:, :dout],
                           preferred_element_type=jnp.float32)
                   + jnp.dot(xb, w[:, dout:], preferred_element_type=jnp.float32)
                   + b)
        else:
            p = jnp.dot(xb, w, preferred_element_type=jnp.float32)
            out = (jnp.dot(a, p[:, :dout].astype(jnp.bfloat16),
                           preferred_element_type=jnp.float32)
                   + p[:, dout:] + b)
        if i < len(layers) - 1:
            out = jnp.maximum(out, 0.0)
        x = out
    zb = x.astype(jnp.bfloat16)
    zs = zb[edge_label_index[0]].astype(jnp.float32)
    zd = zb[edge_label_index[1]].astype(jnp.float32)
    return jnp.sum(zs * zd, axis=-1)


if __name__ == "__main__":
    key = jax.random.PRNGKey(0)
    k_param, k_ids, k_edges, k_query = jax.random.split(key, 4)

    node_dict_size = 32
    node_dim = 16
    hidden_dim = 32
    output_dim = 16
    num_nodes = 64
    num_edges = 128
    num_query_edges = 32

    emb, layers, dims = init_params(
        k_param, node_dict_size, node_dim, hidden_dim, output_dim,
        total_layer_number=4)
    # dims == [16, 64, 48, 32, 16] for these hyperparameters.

    # data.x: (N, 1) integer node-type ids
    node_ids = jax.random.randint(k_ids, (num_nodes, 1), 0, node_dict_size,
                                  dtype=jnp.int32)
    # data.edge_index: (2, E) message edges
    edge_index = jax.random.randint(k_edges, (2, num_edges), 0, num_nodes,
                                    dtype=jnp.int32)
    # edge_label_index: (2, Q) candidate edges to score
    edge_label_index = jax.random.randint(k_query, (2, num_query_edges), 0,
                                          num_nodes, dtype=jnp.int32)

    scores = sage_ep_forward(emb, layers, node_ids, edge_index,
                             edge_label_index)
    scores = jax.block_until_ready(scores)

    assert scores.shape == (num_query_edges,)
    assert scores.dtype == jnp.float32

    # Tight check against the mixed-precision (bf16-in / f32-accumulate)
    # reference that mirrors the kernel math exactly.
    ref_mixed = sage_ep_reference_mixed(emb, layers, node_ids, edge_index,
                                        edge_label_index)
    assert jnp.allclose(scores, ref_mixed, rtol=2e-3, atol=2e-3), (
        "mismatch vs mixed-precision reference", scores, ref_mixed)

    # Sanity check against the exact f32 module semantics: bf16 MXU inputs
    # bound the drift to a few percent of the score scale.
    ref_f32 = sage_ep_reference_f32(emb, layers, node_ids, edge_index,
                                    edge_label_index)
    scale = float(jnp.max(jnp.abs(ref_f32)))
    max_err = float(jnp.max(jnp.abs(scores - ref_f32)))
    assert max_err <= 0.05 * scale + 1e-4, (
        "bf16 drift vs f32 reference too large", max_err, scale)

    print("KERNEL_OK")
</pallas_src>

<mosaic_0001>
module attributes {stable_mosaic.version = 11 : i64} {
  func.func @kernel(%arg0: memref<64x64xbf16, #tpu.memory_space<vmem>>, %arg1: memref<64x16xf32, #tpu.memory_space<vmem>>, %arg2: memref<256x1xi32, #tpu.memory_space<vmem>>, %arg3: memref<16x128xbf16, #tpu.memory_space<vmem>>, %arg4: memref<1x64xf32, #tpu.memory_space<vmem>>, %arg5: memref<64x96xbf16, #tpu.memory_space<vmem>>, %arg6: memref<1x48xf32, #tpu.memory_space<vmem>>, %arg7: memref<48x64xbf16, #tpu.memory_space<vmem>>, %arg8: memref<1x32xf32, #tpu.memory_space<vmem>>, %arg9: memref<32x32xbf16, #tpu.memory_space<vmem>>, %arg10: memref<1x16xf32, #tpu.memory_space<vmem>>, %arg11: memref<8x128xf32, #tpu.memory_space<vmem>>) attributes {dimension_semantics = [], scalar_prefetch = 0 : i64, scratch_operands = 0 : i64, tpu.core_type = #tpu.core_type<tc>} {
    %c0 = arith.constant 0 : index
    %c0_0 = arith.constant 0 : index
    %0 = vector.load %arg0[%c0, %c0_0] : memref<64x64xbf16, #tpu.memory_space<vmem>>, vector<64x64xbf16>
    %c0_1 = arith.constant 0 : index
    %c0_2 = arith.constant 0 : index
    %1 = vector.load %arg1[%c0_1, %c0_2] : memref<64x16xf32, #tpu.memory_space<vmem>>, vector<64x16xf32>
    %c0_3 = arith.constant 0 : index
    %c0_4 = arith.constant 0 : index
    %2 = vector.load %arg3[%c0_3, %c0_4] : memref<16x128xbf16, #tpu.memory_space<vmem>>, vector<16x128xbf16>
    %c0_5 = arith.constant 0 : index
    %c0_6 = arith.constant 0 : index
    %3 = vector.load %arg4[%c0_5, %c0_6] : memref<1x64xf32, #tpu.memory_space<vmem>>, vector<1x64xf32>
    %4 = arith.truncf %1 : vector<64x16xf32> to vector<64x16xbf16>
    %cst = arith.constant dense<0.000000e+00> : vector<64x16xf32>
    %5 = tpu.matmul %0, %4, %cst {dimension_numbers = #tpu.dot_dimension_numbers<[1], [0], [0], [1], [0, 0, 1, 1], [], []>} : vector<64x64xbf16>, vector<64x16xbf16>, vector<64x16xf32> -> vector<64x16xf32>
    %6 = arith.truncf %5 : vector<64x16xf32> to vector<64x16xbf16>
    %7 = vector.extract_strided_slice %2 {offsets = [0, 0], sizes = [16, 64], strides = [1, 1]} : vector<16x128xbf16> to vector<16x64xbf16>
    %cst_7 = arith.constant dense<0.000000e+00> : vector<64x64xf32>
    %8 = tpu.matmul %6, %7, %cst_7 {dimension_numbers = #tpu.dot_dimension_numbers<[1], [0], [0], [1], [0, 0, 1, 1], [], []>} : vector<64x16xbf16>, vector<16x64xbf16>, vector<64x64xf32> -> vector<64x64xf32>
    %9 = vector.extract_strided_slice %2 {offsets = [0, 64], sizes = [16, 64], strides = [1, 1]} : vector<16x128xbf16> to vector<16x64xbf16>
    %cst_8 = arith.constant dense<0.000000e+00> : vector<64x64xf32>
    %10 = tpu.matmul %4, %9, %cst_8 {dimension_numbers = #tpu.dot_dimension_numbers<[1], [0], [0], [1], [0, 0, 1, 1], [], []>} : vector<64x16xbf16>, vector<16x64xbf16>, vector<64x64xf32> -> vector<64x64xf32>
    %11 = arith.addf %8, %10 : vector<64x64xf32>
    %12 = vector.broadcast %3 : vector<1x64xf32> to vector<64x64xf32>
    %13 = arith.addf %11, %12 : vector<64x64xf32>
    %cst_9 = arith.constant 0.000000e+00 : f32
    %14 = vector.broadcast %cst_9 : f32 to vector<64x64xf32>
    %15 = arith.maximumf %13, %14 : vector<64x64xf32>
    %c0_10 = arith.constant 0 : index
    %c0_11 = arith.constant 0 : index
    %16 = vector.load %arg5[%c0_10, %c0_11] : memref<64x96xbf16, #tpu.memory_space<vmem>>, vector<64x96xbf16>
    %c0_12 = arith.constant 0 : index
    %c0_13 = arith.constant 0 : index
    %17 = vector.load %arg6[%c0_12, %c0_13] : memref<1x48xf32, #tpu.memory_space<vmem>>, vector<1x48xf32>
    %18 = arith.truncf %15 : vector<64x64xf32> to vector<64x64xbf16>
    %cst_14 = arith.constant dense<0.000000e+00> : vector<64x96xf32>
    %19 = tpu.matmul %18, %16, %cst_14 {dimension_numbers = #tpu.dot_dimension_numbers<[1], [0], [0], [1], [0, 0, 1, 1], [], []>} : vector<64x64xbf16>, vector<64x96xbf16>, vector<64x96xf32> -> vector<64x96xf32>
    %20 = vector.extract_strided_slice %19 {offsets = [0, 0], sizes = [64, 48], strides = [1, 1]} : vector<64x96xf32> to vector<64x48xf32>
    %21 = arith.truncf %20 : vector<64x48xf32> to vector<64x48xbf16>
    %cst_15 = arith.constant dense<0.000000e+00> : vector<64x48xf32>
    %22 = tpu.matmul %0, %21, %cst_15 {dimension_numbers = #tpu.dot_dimension_numbers<[1], [0], [0], [1], [0, 0, 1, 1], [], []>} : vector<64x64xbf16>, vector<64x48xbf16>, vector<64x48xf32> -> vector<64x48xf32>
    %23 = vector.extract_strided_slice %19 {offsets = [0, 48], sizes = [64, 48], strides = [1, 1]} : vector<64x96xf32> to vector<64x48xf32>
    %24 = arith.addf %22, %23 : vector<64x48xf32>
    %25 = vector.broadcast %17 : vector<1x48xf32> to vector<64x48xf32>
    %26 = arith.addf %24, %25 : vector<64x48xf32>
    %cst_16 = arith.constant 0.000000e+00 : f32
    %27 = vector.broadcast %cst_16 : f32 to vector<64x48xf32>
    %28 = arith.maximumf %26, %27 : vector<64x48xf32>
    %c0_17 = arith.constant 0 : index
    %c0_18 = arith.constant 0 : index
    %29 = vector.load %arg7[%c0_17, %c0_18] : memref<48x64xbf16, #tpu.memory_space<vmem>>, vector<48x64xbf16>
    %c0_19 = arith.constant 0 : index
    %c0_20 = arith.constant 0 : index
    %30 = vector.load %arg8[%c0_19, %c0_20] : memref<1x32xf32, #tpu.memory_space<vmem>>, vector<1x32xf32>
    %31 = arith.truncf %28 : vector<64x48xf32> to vector<64x48xbf16>
    %cst_21 = arith.constant dense<0.000000e+00> : vector<64x64xf32>
    %32 = tpu.matmul %31, %29, %cst_21 {dimension_numbers = #tpu.dot_dimension_numbers<[1], [0], [0], [1], [0, 0, 1, 1], [], []>} : vector<64x48xbf16>, vector<48x64xbf16>, vector<64x64xf32> -> vector<64x64xf32>
    %33 = vector.extract_strided_slice %32 {offsets = [0, 0], sizes = [64, 32], strides = [1, 1]} : vector<64x64xf32> to vector<64x32xf32>
    %34 = arith.truncf %33 : vector<64x32xf32> to vector<64x32xbf16>
    %cst_22 = arith.constant dense<0.000000e+00> : vector<64x32xf32>
    %35 = tpu.matmul %0, %34, %cst_22 {dimension_numbers = #tpu.dot_dimension_numbers<[1], [0], [0], [1], [0, 0, 1, 1], [], []>} : vector<64x64xbf16>, vector<64x32xbf16>, vector<64x32xf32> -> vector<64x32xf32>
    %36 = vector.extract_strided_slice %32 {offsets = [0, 32], sizes = [64, 32], strides = [1, 1]} : vector<64x64xf32> to vector<64x32xf32>
    %37 = arith.addf %35, %36 : vector<64x32xf32>
    %38 = vector.broadcast %30 : vector<1x32xf32> to vector<64x32xf32>
    %39 = arith.addf %37, %38 : vector<64x32xf32>
    %cst_23 = arith.constant 0.000000e+00 : f32
    %40 = vector.broadcast %cst_23 : f32 to vector<64x32xf32>
    %41 = arith.maximumf %39, %40 : vector<64x32xf32>
    %c0_24 = arith.constant 0 : index
    %c0_25 = arith.constant 0 : index
    %42 = vector.load %arg9[%c0_24, %c0_25] : memref<32x32xbf16, #tpu.memory_space<vmem>>, vector<32x32xbf16>
    %c0_26 = arith.constant 0 : index
    %c0_27 = arith.constant 0 : index
    %43 = vector.load %arg10[%c0_26, %c0_27] : memref<1x16xf32, #tpu.memory_space<vmem>>, vector<1x16xf32>
    %44 = arith.truncf %41 : vector<64x32xf32> to vector<64x32xbf16>
    %cst_28 = arith.constant dense<0.000000e+00> : vector<64x32xf32>
    %45 = tpu.matmul %44, %42, %cst_28 {dimension_numbers = #tpu.dot_dimension_numbers<[1], [0], [0], [1], [0, 0, 1, 1], [], []>} : vector<64x32xbf16>, vector<32x32xbf16>, vector<64x32xf32> -> vector<64x32xf32>
    %46 = vector.extract_strided_slice %45 {offsets = [0, 0], sizes = [64, 16], strides = [1, 1]} : vector<64x32xf32> to vector<64x16xf32>
    %47 = arith.truncf %46 : vector<64x16xf32> to vector<64x16xbf16>
    %cst_29 = arith.constant dense<0.000000e+00> : vector<64x16xf32>
    %48 = tpu.matmul %0, %47, %cst_29 {dimension_numbers = #tpu.dot_dimension_numbers<[1], [0], [0], [1], [0, 0, 1, 1], [], []>} : vector<64x64xbf16>, vector<64x16xbf16>, vector<64x16xf32> -> vector<64x16xf32>
    %49 = vector.extract_strided_slice %45 {offsets = [0, 16], sizes = [64, 16], strides = [1, 1]} : vector<64x32xf32> to vector<64x16xf32>
    %50 = arith.addf %48, %49 : vector<64x16xf32>
    %51 = vector.broadcast %43 : vector<1x16xf32> to vector<64x16xf32>
    %52 = arith.addf %50, %51 : vector<64x16xf32>
    %c0_30 = arith.constant 0 : index
    %c0_31 = arith.constant 0 : index
    %53 = vector.load %arg2[%c0_30, %c0_31] : memref<256x1xi32, #tpu.memory_space<vmem>>, vector<256x1xi32>
    %54 = tpu.iota {dimensions = array<i32: 1>} : vector<256x64xi32>
    %55 = vector.broadcast %53 : vector<256x1xi32> to vector<256x64xi32>
    %56 = arith.cmpi eq, %54, %55 : vector<256x64xi32>
    %57 = arith.extui %56 : vector<256x64xi1> to vector<256x64xi32>
    %58 = arith.sitofp %57 : vector<256x64xi32> to vector<256x64xf32>
    %59 = arith.truncf %58 : vector<256x64xf32> to vector<256x64xbf16>
    %60 = arith.truncf %52 : vector<64x16xf32> to vector<64x16xbf16>
    %cst_32 = arith.constant dense<0.000000e+00> : vector<256x16xf32>
    %61 = tpu.matmul %59, %60, %cst_32 {dimension_numbers = #tpu.dot_dimension_numbers<[1], [0], [0], [1], [0, 0, 1, 1], [], []>} : vector<256x64xbf16>, vector<64x16xbf16>, vector<256x16xf32> -> vector<256x16xf32>
    %62 = vector.extract_strided_slice %61 {offsets = [0, 0], sizes = [128, 16], strides = [1, 1]} : vector<256x16xf32> to vector<128x16xf32>
    %63 = vector.extract_strided_slice %61 {offsets = [128, 0], sizes = [128, 16], strides = [1, 1]} : vector<256x16xf32> to vector<128x16xf32>
    %64 = arith.mulf %62, %63 : vector<128x16xf32>
    %cst_33 = arith.constant 1.000000e+00 : f32
    %65 = vector.broadcast %cst_33 : f32 to vector<8x16xf32>
    %cst_34 = arith.constant dense<0.000000e+00> : vector<8x128xf32>
    %66 = tpu.matmul %65, %64, %cst_34 {dimension_numbers = #tpu.dot_dimension_numbers<[1], [1], [0], [0], [0, 0, 1, 0], [], []>} : vector<8x16xf32>, vector<128x16xf32>, vector<8x128xf32> -> vector<8x128xf32>
    %c0_35 = arith.constant 0 : index
    %c0_36 = arith.constant 0 : index
    %67 = vector.load %arg11[%c0_35, %c0_36] : memref<8x128xf32, #tpu.memory_space<vmem>>, vector<8x128xf32>
    tpu.vector_store %arg11[%c0_35, %c0_36], %66 {strides = array<i32>} : memref<8x128xf32, #tpu.memory_space<vmem>>, vector<8x128xf32>,
    return
  }
}

</mosaic_0001>

<llo_original>
// kernel: tpu_custom_call.1
$region0: #{tpu_custom_call.1}
  #allocation0 [shape = 'u32[]', space=smem, size = 0x4, offset = 0x4, fixed_abs, tag = 'smem constant byte address 0x4 - core index']
  #allocation1 [shape = 'u32[144,128]{1,0:T(1,128)}', space=vmem, size = 0x12000, scoped, tag = 'internal scratch']
  %s0 = inlined_call_operand.vmem [shape: bf16[64,64], index: 0, kind: input, shape index: {}]
  %s1 = inlined_call_operand.vmem [shape: f32[64,16], index: 1, kind: input, shape index: {}]
  %s2 = inlined_call_operand.vmem [shape: s32[256,1], index: 2, kind: input, shape index: {}]
  %s3 = inlined_call_operand.vmem [shape: bf16[16,128], index: 3, kind: input, shape index: {}]
  %s4 = inlined_call_operand.vmem [shape: f32[1,64], index: 4, kind: input, shape index: {}]
  %s5 = inlined_call_operand.vmem [shape: bf16[64,96], index: 5, kind: input, shape index: {}]
  %s6 = inlined_call_operand.vmem [shape: f32[1,48], index: 6, kind: input, shape index: {}]
  %s7 = inlined_call_operand.vmem [shape: bf16[48,64], index: 7, kind: input, shape index: {}]
  %s8 = inlined_call_operand.vmem [shape: f32[1,32], index: 8, kind: input, shape index: {}]
  %s9 = inlined_call_operand.vmem [shape: bf16[32,32], index: 9, kind: input, shape index: {}]
  %s10 = inlined_call_operand.vmem [shape: f32[1,16], index: 10, kind: input, shape index: {}]
  %s11 = inlined_call_operand.hbm [shape: f32[8,128], index: 11, kind: output, shape index: {}]
  %s12 = sld [smem:[#allocation0]]
  $region54: #{tpu_custom_call.1} parent=0
    _
  %s14 = ssub.s32 1, %s12
  %s15 = scalar_select 0, %s14, %s12
  $region1: #{tpu_custom_call.1} parent=0
    #allocation2 [shape = 'u8[4096]{0}', space=vmem, size = 0x1000, scoped, tag = 'output window, operand 0, single buffered']
    #allocation3 [shape = 's32[1]{0}', space=sflag, size = 0x4, scoped, tag = 'scoped memory for tpu_custom_call.1']
    %16 = vsyncpa [#allocation3], 0
    // Predicated region
    $region2: #{tpu_custom_call.1} parent=1 // pred_check
      _
    $region3: #{tpu_custom_call.1} parent=1 // pred_check_branch
      %18 = sbr.rel (0) target = $region5
    $region4: #{tpu_custom_call.1} parent=1 // pred_region
      _
    $region5: #{tpu_custom_call.1} parent=1 // pred_fallthru
      _
    // Predicated region
    $region6: #{tpu_custom_call.1} parent=1 // pred_check
      _
    $region7: #{tpu_custom_call.1} parent=1 // pred_check_branch
      %20 = sbr.rel (0) target = $region9
    $region8: #{tpu_custom_call.1} parent=1 // pred_region
      _
    $region9: #{tpu_custom_call.1} parent=1 // pred_fallthru
      _
    // Predicated region
    $region10: #{tpu_custom_call.1} parent=1 // pred_check
      _
    $region11: #{tpu_custom_call.1} parent=1 // pred_check_branch
      %22 = sbr.rel (0) target = $region13
    $region12: #{tpu_custom_call.1} parent=1 // pred_region
      _
    $region13: #{tpu_custom_call.1} parent=1 // pred_fallthru
      _
    // Predicated region
    $region14: #{tpu_custom_call.1} parent=1 // pred_check
      _
    $region15: #{tpu_custom_call.1} parent=1 // pred_check_branch
      %24 = sbr.rel (0) target = $region17
    $region16: #{tpu_custom_call.1} parent=1 // pred_region
      _
    $region17: #{tpu_custom_call.1} parent=1 // pred_fallthru
      _
    // Predicated region
    $region18: #{tpu_custom_call.1} parent=1 // pred_check
      _
    $region19: #{tpu_custom_call.1} parent=1 // pred_check_branch
      %26 = sbr.rel (0) target = $region21
    $region20: #{tpu_custom_call.1} parent=1 // pred_region
      _
    $region21: #{tpu_custom_call.1} parent=1 // pred_fallthru
      _
    // Predicated region
    $region22: #{tpu_custom_call.1} parent=1 // pred_check
      _
    $region23: #{tpu_custom_call.1} parent=1 // pred_check_branch
      %28 = sbr.rel (0) target = $region25
    $region24: #{tpu_custom_call.1} parent=1 // pred_region
      _
    $region25: #{tpu_custom_call.1} parent=1 // pred_fallthru
      _
    // Predicated region
    $region26: #{tpu_custom_call.1} parent=1 // pred_check
      _
    $region27: #{tpu_custom_call.1} parent=1 // pred_check_branch
      %30 = sbr.rel (0) target = $region29
    $region28: #{tpu_custom_call.1} parent=1 // pred_region
      _
    $region29: #{tpu_custom_call.1} parent=1 // pred_fallthru
      _
    // Predicated region
    $region30: #{tpu_custom_call.1} parent=1 // pred_check
      _
    $region31: #{tpu_custom_call.1} parent=1 // pred_check_branch
      %32 = sbr.rel (0) target = $region33
    $region32: #{tpu_custom_call.1} parent=1 // pred_region
      _
    $region33: #{tpu_custom_call.1} parent=1 // pred_fallthru
      _
    // Predicated region
    $region34: #{tpu_custom_call.1} parent=1 // pred_check
      _
    $region35: #{tpu_custom_call.1} parent=1 // pred_check_branch
      %34 = sbr.rel (0) target = $region37
    $region36: #{tpu_custom_call.1} parent=1 // pred_region
      _
    $region37: #{tpu_custom_call.1} parent=1 // pred_fallthru
      _
    // Predicated region
    $region38: #{tpu_custom_call.1} parent=1 // pred_check
      _
    $region39: #{tpu_custom_call.1} parent=1 // pred_check_branch
      %36 = sbr.rel (0) target = $region41
    $region40: #{tpu_custom_call.1} parent=1 // pred_region
      _
    $region41: #{tpu_custom_call.1} parent=1 // pred_fallthru
      _
    // Predicated region
    $region42: #{tpu_custom_call.1} parent=1 // pred_check
      _
    $region43: #{tpu_custom_call.1} parent=1 // pred_check_branch
      %38 = sbr.rel (0) target = $region45
    $region44: #{tpu_custom_call.1} parent=1 // pred_region
      _
    $region45: #{tpu_custom_call.1} parent=1 // pred_fallthru
      _
    %v40 = vld [vmem:[%s0] sm:$0xf]
    %v41 = vld [vmem:[%s0 + $0x4] sm:$0xf]
    %v42 = vld [vmem:[%s0 + $0x8] sm:$0xf]
    %v43 = vld [vmem:[%s0 + $0xc] sm:$0xf]
    %v44 = vld [vmem:[%s0 + $0x10] sm:$0xf]
    %v45 = vld [vmem:[%s0 + $0x14] sm:$0xf]
    %v46 = vld [vmem:[%s0 + $0x18] sm:$0xf]
    %v47 = vld [vmem:[%s0 + $0x1c] sm:$0xf]
    %v48 = vld [vmem:[%s1] sm:$0xff]
    %v49 = vld [vmem:[%s1 + $0x8] sm:$0xff]
    %v50 = vld [vmem:[%s1 + $0x10] sm:$0xff]
    %v51 = vld [vmem:[%s1 + $0x18] sm:$0xff]
    %v52 = vld [vmem:[%s1 + $0x20] sm:$0xff]
    %v53 = vld [vmem:[%s1 + $0x28] sm:$0xff]
    %v54 = vld [vmem:[%s1 + $0x30] sm:$0xff]
    %v55 = vld [vmem:[%s1 + $0x38] sm:$0xff]
    %v56 = vld [vmem:[%s3] sm:$0xf]
    %v57 = vld [vmem:[%s3 + $0x4] sm:$0xf]
    %v58 = vld [vmem:[%s4] sm:$0x1]
    %v59 = vpack.c.bf16 %v49, %v48
    %v60 = vpack.c.bf16 %v51, %v50
    %v61 = vpack.c.bf16 %v53, %v52
    %v62 = vpack.c.bf16 %v55, %v54
    %v71 = vunpack.c.l.b16 %v40
    %v72 = vunpack.c.l.b16 %v41
    %v73 = vunpack.c.l.b16 %v42
    %v74 = vunpack.c.l.b16 %v43
    %v75 = vunpack.c.l.b16 %v44
    %v76 = vunpack.c.l.b16 %v45
    %v77 = vunpack.c.l.b16 %v46
    %v78 = vunpack.c.l.b16 %v47
    %v79 = vpack.c.b16 %v72, %v71
    %v80 = vpack.c.b16 %v74, %v73
    %v81 = vpack.c.b16 %v76, %v75
    %v82 = vpack.c.b16 %v78, %v77
    %vm83 = vcmask 523264
    %v85 = vsel %vm83, %v79, 0
    %v88 = vsel %vm83, %v80, 0
    %v91 = vsel %vm83, %v81, 0
    %v94 = vsel %vm83, %v82, 0
    %96 = vmatprep.subr.bf16.mxu0 0
    %97 = vmatpush1.bf16.msra.mxu0 %v59
    %98 = vmatprep.subr.bf16.mxu0 0
    %99 = vmatpush1.bf16.msra.mxu0 %v60
    %100 = vmatprep.subr.bf16.mxu0 0
    %101 = vmatpush1.bf16.msra.mxu0 %v61
    %102 = vmatprep.subr.bf16.mxu0 0
    %103 = vmatpush1.bf16.msra.mxu0 %v62
    %104 = vmatprep.subr.bf16.mxu0 0
    %105 = vmatpush1.bf16.msra.mxu0 0
    %106 = vmatprep.subr.bf16.mxu0 0
    %107 = vmatpush1.bf16.msra.mxu0 0
    %108 = vmatprep.subr.bf16.mxu0 0
    %109 = vmatpush1.bf16.msra.mxu0 0
    %110 = vmatprep.subr.bf16.mxu0 0
    %111 = vmatpush1.bf16.msra.mxu0 0
    %112 = vmatprep.subr.bf16.mxu0 0
    %113 = vmatpush1.bf16.msra.mxu0 0
    %114 = vmatprep.subr.bf16.mxu0 0
    %115 = vmatpush1.bf16.msra.mxu0 0
    %116 = vmatprep.subr.bf16.mxu0 0
    %117 = vmatpush1.bf16.msra.mxu0 0
    %118 = vmatprep.subr.bf16.mxu0 0
    %119 = vmatpush1.bf16.msra.mxu0 0
    %120 = vmatprep.subr.bf16.mxu0 0
    %121 = vmatpush1.bf16.msra.mxu0 0
    %122 = vmatprep.subr.bf16.mxu0 0
    %123 = vmatpush1.bf16.msra.mxu0 0
    %124 = vmatprep.subr.bf16.mxu0 0
    %125 = vmatpush1.bf16.msra.mxu0 0
    %126 = vmatprep.subr.bf16.mxu0 0
    %127 = vmatpush1.bf16.msra.mxu0 0
    %128 = vmatprep.mubr.bf16.mxu0 0
    %129 = vmatmul.mubr.bf16.gmra.mrb[0].mxu0 %v85
    %v130 = vpop.f32.mrb[0].mxu0
    %v131 = vadd.f32 0.0, %v130
    %v132 = vpop.f32.mrb[0].mxu0
    %v133 = vpop.f32.mrb[0].mxu0
    %v134 = vadd.f32 0.0, %v133
    %v135 = vpop.f32.mrb[0].mxu0
    %136 = vmatprep.mubr.bf16.mxu0 0
    %137 = vmatmul.mubr.bf16.gmra.mrb[0].mxu0 %v88
    %v138 = vpop.f32.mrb[0].mxu0
    %v139 = vadd.f32 0.0, %v138
    %v140 = vpop.f32.mrb[0].mxu0
    %v141 = vpop.f32.mrb[0].mxu0
    %v142 = vadd.f32 0.0, %v141
    %v143 = vpop.f32.mrb[0].mxu0
    %144 = vmatprep.mubr.bf16.mxu0 0
    %145 = vmatmul.mubr.bf16.gmra.mrb[0].mxu0 %v91
    %v146 = vpop.f32.mrb[0].mxu0
    %v147 = vadd.f32 0.0, %v146
    %v148 = vpop.f32.mrb[0].mxu0
    %v149 = vpop.f32.mrb[0].mxu0
    %v150 = vadd.f32 0.0, %v149
    %v151 = vpop.f32.mrb[0].mxu0
    %152 = vmatprep.mubr.bf16.mxu0 0
    %153 = vmatmul.mubr.bf16.gmra.mrb[0].mxu0 %v94
    %v154 = vpop.f32.mrb[0].mxu0
    %v155 = vadd.f32 0.0, %v154
    %v156 = vpop.f32.mrb[0].mxu0
    %v157 = vpop.f32.mrb[0].mxu0
    %v158 = vadd.f32 0.0, %v157
    %v159 = vpop.f32.mrb[0].mxu0
    %160 = vdwg.mxu0
    %v161 = vpack.c.bf16 %v134, %v131
    %v162 = vpack.c.bf16 %v142, %v139
    %v163 = vpack.c.bf16 %v150, %v147
    %v164 = vpack.c.bf16 %v158, %v155
    %v167 = vunpack.c.l.b16 %v56
    %v168 = vunpack.c.l.b16 %v57
    %v169 = vpack.c.b16 %v168, %v167
    %170 = vrot.lane.b32.xlu0 %v169, 64
    %v171 = vpop.permute.xlu0 %170
    %vm173 = vcmask 130048
    %v175 = vsel %vm173, %v59, 0
    %v178 = vsel %vm173, %v60, 0
    %v181 = vsel %vm173, %v61, 0
    %v184 = vsel %vm173, %v62, 0
    %186 = vmatprep.subr.bf16.mxu0 0
    %187 = vmatpush1.bf16.msra.mxu0 %v171
    %188 = vmatprep.subr.bf16.mxu0 0
    %189 = vmatpush1.bf16.msra.mxu0 0
    %190 = vmatprep.subr.bf16.mxu0 0
    %191 = vmatpush1.bf16.msra.mxu0 0
    %192 = vmatprep.subr.bf16.mxu0 0
    %193 = vmatpush1.bf16.msra.mxu0 0
    %194 = vmatprep.subr.bf16.mxu0 0
    %195 = vmatpush1.bf16.msra.mxu0 0
    %196 = vmatprep.subr.bf16.mxu0 0
    %197 = vmatpush1.bf16.msra.mxu0 0
    %198 = vmatprep.subr.bf16.mxu0 0
    %199 = vmatpush1.bf16.msra.mxu0 0
    %200 = vmatprep.subr.bf16.mxu0 0
    %201 = vmatpush1.bf16.msra.mxu0 0
    %202 = vmatprep.subr.bf16.mxu0 0
    %203 = vmatpush1.bf16.msra.mxu0 0
    %204 = vmatprep.subr.bf16.mxu0 0
    %205 = vmatpush1.bf16.msra.mxu0 0
    %206 = vmatprep.subr.bf16.mxu0 0
    %207 = vmatpush1.bf16.msra.mxu0 0
    %208 = vmatprep.subr.bf16.mxu0 0
    %209 = vmatpush1.bf16.msra.mxu0 0
    %210 = vmatprep.subr.bf16.mxu0 0
    %211 = vmatpush1.bf16.msra.mxu0 0
    %212 = vmatprep.subr.bf16.mxu0 0
    %213 = vmatpush1.bf16.msra.mxu0 0
    %214 = vmatprep.subr.bf16.mxu0 0
    %215 = vmatpush1.bf16.msra.mxu0 0
    %216 = vmatprep.subr.bf16.mxu0 0
    %217 = vmatpush1.bf16.msra.mxu0 0
    %218 = vmatprep.mubr.bf16.mxu0 0
    %219 = vmatmul.mubr.bf16.gmra.mrb[0].mxu0 %v175
    %v220 = vpop.f32.mrb[0].mxu0
    %v221 = vadd.f32 0.0, %v220
    %v222 = vpop.f32.mrb[0].mxu0
    %v223 = vpop.f32.mrb[0].mxu0
    %v224 = vadd.f32 0.0, %v223
    %v225 = vpop.f32.mrb[0].mxu0
    %226 = vmatprep.mubr.bf16.mxu0 0
    %227 = vmatmul.mubr.bf16.gmra.mrb[0].mxu0 %v178
    %v228 = vpop.f32.mrb[0].mxu0
    %v229 = vadd.f32 0.0, %v228
    %v230 = vpop.f32.mrb[0].mxu0
    %v231 = vpop.f32.mrb[0].mxu0
    %v232 = vadd.f32 0.0, %v231
    %v233 = vpop.f32.mrb[0].mxu0
    %234 = vmatprep.mubr.bf16.mxu0 0
    %235 = vmatmul.mubr.bf16.gmra.mrb[0].mxu0 %v181
    %v236 = vpop.f32.mrb[0].mxu0
    %v237 = vadd.f32 0.0, %v236
    %v238 = vpop.f32.mrb[0].mxu0
    %v239 = vpop.f32.mrb[0].mxu0
    %v240 = vadd.f32 0.0, %v239
    %v241 = vpop.f32.mrb[0].mxu0
    %242 = vmatprep.mubr.bf16.mxu0 0
    %243 = vmatmul.mubr.bf16.gmra.mrb[0].mxu0 %v184
    %v244 = vpop.f32.mrb[0].mxu0
    %v245 = vadd.f32 0.0, %v244
    %v246 = vpop.f32.mrb[0].mxu0
    %v247 = vpop.f32.mrb[0].mxu0
    %v248 = vadd.f32 0.0, %v247
    %v249 = vpop.f32.mrb[0].mxu0
    %250 = vdwg.mxu0
    %v253 = vsel %vm173, %v161, 0
    %v256 = vsel %vm173, %v162, 0
    %v259 = vsel %vm173, %v163, 0
    %v262 = vsel %vm173, %v164, 0
    %264 = vmatprep.subr.bf16.mxu0 0
    %265 = vmatpush1.bf16.msra.mxu0 %v169
    %266 = vmatprep.subr.bf16.mxu0 0
    %267 = vmatpush1.bf16.msra.mxu0 0
    %268 = vmatprep.subr.bf16.mxu0 0
    %269 = vmatpush1.bf16.msra.mxu0 0
    %270 = vmatprep.subr.bf16.mxu0 0
    %271 = vmatpush1.bf16.msra.mxu0 0
    %272 = vmatprep.subr.bf16.mxu0 0
    %273 = vmatpush1.bf16.msra.mxu0 0
    %274 = vmatprep.subr.bf16.mxu0 0
    %275 = vmatpush1.bf16.msra.mxu0 0
    %276 = vmatprep.subr.bf16.mxu0 0
    %277 = vmatpush1.bf16.msra.mxu0 0
    %278 = vmatprep.subr.bf16.mxu0 0
    %279 = vmatpush1.bf16.msra.mxu0 0
    %280 = vmatprep.subr.bf16.mxu0 0
    %281 = vmatpush1.bf16.msra.mxu0 0
    %282 = vmatprep.subr.bf16.mxu0 0
    %283 = vmatpush1.bf16.msra.mxu0 0
    %284 = vmatprep.subr.bf16.mxu0 0
    %285 = vmatpush1.bf16.msra.mxu0 0
    %286 = vmatprep.subr.bf16.mxu0 0
    %287 = vmatpush1.bf16.msra.mxu0 0
    %288 = vmatprep.subr.bf16.mxu0 0
    %289 = vmatpush1.bf16.msra.mxu0 0
    %290 = vmatprep.subr.bf16.mxu0 0
    %291 = vmatpush1.bf16.msra.mxu0 0
    %292 = vmatprep.subr.bf16.mxu0 0
    %293 = vmatpush1.bf16.msra.mxu0 0
    %294 = vmatprep.subr.bf16.mxu0 0
    %295 = vmatpush1.bf16.msra.mxu0 0
    %296 = vmatprep.mubr.bf16.mxu0 0
    %297 = vmatmul.mubr.bf16.gmra.mrb[0].mxu0 %v253
    %v298 = vpop.f32.mrb[0].mxu0
    %v299 = vadd.f32 %v221, %v298
    %v300 = vpop.f32.mrb[0].mxu0
    %v301 = vpop.f32.mrb[0].mxu0
    %v302 = vadd.f32 %v224, %v301
    %v303 = vpop.f32.mrb[0].mxu0
    %304 = vmatprep.mubr.bf16.mxu0 0
    %305 = vmatmul.mubr.bf16.gmra.mrb[0].mxu0 %v256
    %v306 = vpop.f32.mrb[0].mxu0
    %v307 = vadd.f32 %v229, %v306
    %v308 = vpop.f32.mrb[0].mxu0
    %v309 = vpop.f32.mrb[0].mxu0
    %v310 = vadd.f32 %v232, %v309
    %v311 = vpop.f32.mrb[0].mxu0
    %312 = vmatprep.mubr.bf16.mxu0 0
    %313 = vmatmul.mubr.bf16.gmra.mrb[0].mxu0 %v259
    %v314 = vpop.f32.mrb[0].mxu0
    %v315 = vadd.f32 %v237, %v314
    %v316 = vpop.f32.mrb[0].mxu0
    %v317 = vpop.f32.mrb[0].mxu0
    %v318 = vadd.f32 %v240, %v317
    %v319 = vpop.f32.mrb[0].mxu0
    %320 = vmatprep.mubr.bf16.mxu0 0
    %321 = vmatmul.mubr.bf16.gmra.mrb[0].mxu0 %v262
    %v322 = vpop.f32.mrb[0].mxu0
    %v323 = vadd.f32 %v245, %v322
    %v324 = vpop.f32.mrb[0].mxu0
    %v325 = vpop.f32.mrb[0].mxu0
    %v326 = vadd.f32 %v248, %v325
    %v327 = vpop.f32.mrb[0].mxu0
    %328 = vdwg.mxu0
    %v330 = vlaneseq
    %v331 = vshrl.u32 %v330, 7
    %v332 = vsub.s32 0, %v331
    %v333 = vrot.slane %v58, %v332
    %v335 = vadd.f32 %v299, %v333
    %v336 = vadd.f32 %v302, %v333
    %v337 = vadd.f32 %v307, %v333
    %v338 = vadd.f32 %v310, %v333
    %v339 = vadd.f32 %v315, %v333
    %v340 = vadd.f32 %v318, %v333
    %v341 = vadd.f32 %v323, %v333
    %v342 = vadd.f32 %v326, %v333
    %v343 = vmax.f32 %v335, 0.0
    %v344 = vmax.f32 %v336, 0.0
    %v345 = vmax.f32 %v337, 0.0
    %v346 = vmax.f32 %v338, 0.0
    %v347 = vmax.f32 %v339, 0.0
    %v348 = vmax.f32 %v340, 0.0
    %v349 = vmax.f32 %v341, 0.0
    %v350 = vmax.f32 %v342, 0.0
    %v351 = vld [vmem:[%s5] sm:$0xf]
    %v352 = vld [vmem:[%s5 + $0x4] sm:$0xf]
    %v353 = vld [vmem:[%s5 + $0x8] sm:$0xf]
    %v354 = vld [vmem:[%s5 + $0xc] sm:$0xf]
    %v355 = vld [vmem:[%s5 + $0x10] sm:$0xf]
    %v356 = vld [vmem:[%s5 + $0x14] sm:$0xf]
    %v357 = vld [vmem:[%s5 + $0x18] sm:$0xf]
    %v358 = vld [vmem:[%s5 + $0x1c] sm:$0xf]
    %v359 = vld [vmem:[%s6] sm:$0x1]
    %v360 = vpack.c.bf16 %v344, %v343
    %v361 = vpack.c.bf16 %v346, %v345
    %v362 = vpack.c.bf16 %v348, %v347
    %v363 = vpack.c.bf16 %v350, %v349
    %v372 = vunpack.c.l.b16 %v351
    %v373 = vunpack.c.l.b16 %v352
    %v374 = vunpack.c.l.b16 %v353
    %v375 = vunpack.c.l.b16 %v354
    %v376 = vunpack.c.l.b16 %v355
    %v377 = vunpack.c.l.b16 %v356
    %v378 = vunpack.c.l.b16 %v357
    %v379 = vunpack.c.l.b16 %v358
    %v380 = vpack.c.b16 %v373, %v372
    %v381 = vpack.c.b16 %v375, %v374
    %v382 = vpack.c.b16 %v377, %v376
    %v383 = vpack.c.b16 %v379, %v378
    %v389 = vsel %vm83, %v360, 0
    %v392 = vsel %vm83, %v361, 0
    %v395 = vsel %vm83, %v362, 0
    %v398 = vsel %vm83, %v363, 0
    %400 = vmatprep.subr.bf16.mxu0 0
    %401 = vmatpush1.bf16.msra.mxu0 %v380
    %402 = vmatprep.subr.bf16.mxu0 0
    %403 = vmatpush1.bf16.msra.mxu0 %v381
    %404 = vmatprep.subr.bf16.mxu0 0
    %405 = vmatpush1.bf16.msra.mxu0 %v382
    %406 = vmatprep.subr.bf16.mxu0 0
    %407 = vmatpush1.bf16.msra.mxu0 %v383
    %408 = vmatprep.subr.bf16.mxu0 0
    %409 = vmatpush1.bf16.msra.mxu0 0
    %410 = vmatprep.subr.bf16.mxu0 0
    %411 = vmatpush1.bf16.msra.mxu0 0
    %412 = vmatprep.subr.bf16.mxu0 0
    %413 = vmatpush1.bf16.msra.mxu0 0
    %414 = vmatprep.subr.bf16.mxu0 0
    %415 = vmatpush1.bf16.msra.mxu0 0
    %416 = vmatprep.subr.bf16.mxu0 0
    %417 = vmatpush1.bf16.msra.mxu0 0
    %418 = vmatprep.subr.bf16.mxu0 0
    %419 = vmatpush1.bf16.msra.mxu0 0
    %420 = vmatprep.subr.bf16.mxu0 0
    %421 = vmatpush1.bf16.msra.mxu0 0
    %422 = vmatprep.subr.bf16.mxu0 0
    %423 = vmatpush1.bf16.msra.mxu0 0
    %424 = vmatprep.subr.bf16.mxu0 0
    %425 = vmatpush1.bf16.msra.mxu0 0
    %426 = vmatprep.subr.bf16.mxu0 0
    %427 = vmatpush1.bf16.msra.mxu0 0
    %428 = vmatprep.subr.bf16.mxu0 0
    %429 = vmatpush1.bf16.msra.mxu0 0
    %430 = vmatprep.subr.bf16.mxu0 0
    %431 = vmatpush1.bf16.msra.mxu0 0
    %432 = vmatprep.mubr.bf16.mxu0 0
    %433 = vmatmul.mubr.bf16.gmra.mrb[0].mxu0 %v389
    %v434 = vpop.f32.mrb[0].mxu0
    %v435 = vadd.f32 0.0, %v434
    %v436 = vpop.f32.mrb[0].mxu0
    %v437 = vpop.f32.mrb[0].mxu0
    %v438 = vadd.f32 0.0, %v437
    %v439 = vpop.f32.mrb[0].mxu0
    %440 = vmatprep.mubr.bf16.mxu0 0
    %441 = vmatmul.mubr.bf16.gmra.mrb[0].mxu0 %v392
    %v442 = vpop.f32.mrb[0].mxu0
    %v443 = vadd.f32 0.0, %v442
    %v444 = vpop.f32.mrb[0].mxu0
    %v445 = vpop.f32.mrb[0].mxu0
    %v446 = vadd.f32 0.0, %v445
    %v447 = vpop.f32.mrb[0].mxu0
    %448 = vmatprep.mubr.bf16.mxu0 0
    %449 = vmatmul.mubr.bf16.gmra.mrb[0].mxu0 %v395
    %v450 = vpop.f32.mrb[0].mxu0
    %v451 = vadd.f32 0.0, %v450
    %v452 = vpop.f32.mrb[0].mxu0
    %v453 = vpop.f32.mrb[0].mxu0
    %v454 = vadd.f32 0.0, %v453
    %v455 = vpop.f32.mrb[0].mxu0
    %456 = vmatprep.mubr.bf16.mxu0 0
    %457 = vmatmul.mubr.bf16.gmra.mrb[0].mxu0 %v398
    %v458 = vpop.f32.mrb[0].mxu0
    %v459 = vadd.f32 0.0, %v458
    %v460 = vpop.f32.mrb[0].mxu0
    %v461 = vpop.f32.mrb[0].mxu0
    %v462 = vadd.f32 0.0, %v461
    %v463 = vpop.f32.mrb[0].mxu0
    %464 = vdwg.mxu0
    %v465 = vpack.c.bf16 %v438, %v435
    %v466 = vpack.c.bf16 %v446, %v443
    %v467 = vpack.c.bf16 %v454, %v451
    %v468 = vpack.c.bf16 %v462, %v459
    %477 = vrot.lane.b32.xlu0 %v435, 80
    %v478 = vpop.permute.xlu0 %477
    %479 = vrot.lane.b32.xlu0 %v438, 80
    %v480 = vpop.permute.xlu0 %479
    %481 = vrot.lane.b32.xlu0 %v443, 80
    %v482 = vpop.permute.xlu0 %481
    %483 = vrot.lane.b32.xlu0 %v446, 80
    %v484 = vpop.permute.xlu0 %483
    %485 = vrot.lane.b32.xlu0 %v451, 80
    %v486 = vpop.permute.xlu0 %485
    %487 = vrot.lane.b32.xlu0 %v454, 80
    %v488 = vpop.permute.xlu0 %487
    %489 = vrot.lane.b32.xlu0 %v459, 80
    %v490 = vpop.permute.xlu0 %489
    %491 = vrot.lane.b32.xlu0 %v462, 80
    %v492 = vpop.permute.xlu0 %491
    %501 = vmatprep.subr.bf16.mxu0 0
    %502 = vmatpush1.bf16.msra.mxu0 %v465
    %503 = vmatprep.subr.bf16.mxu0 0
    %504 = vmatpush1.bf16.msra.mxu0 %v466
    %505 = vmatprep.subr.bf16.mxu0 0
    %506 = vmatpush1.bf16.msra.mxu0 %v467
    %507 = vmatprep.subr.bf16.mxu0 0
    %508 = vmatpush1.bf16.msra.mxu0 %v468
    %509 = vmatprep.subr.bf16.mxu0 0
    %510 = vmatpush1.bf16.msra.mxu0 0
    %511 = vmatprep.subr.bf16.mxu0 0
    %512 = vmatpush1.bf16.msra.mxu0 0
    %513 = vmatprep.subr.bf16.mxu0 0
    %514 = vmatpush1.bf16.msra.mxu0 0
    %515 = vmatprep.subr.bf16.mxu0 0
    %516 = vmatpush1.bf16.msra.mxu0 0
    %517 = vmatprep.subr.bf16.mxu0 0
    %518 = vmatpush1.bf16.msra.mxu0 0
    %519 = vmatprep.subr.bf16.mxu0 0
    %520 = vmatpush1.bf16.msra.mxu0 0
    %521 = vmatprep.subr.bf16.mxu0 0
    %522 = vmatpush1.bf16.msra.mxu0 0
    %523 = vmatprep.subr.bf16.mxu0 0
    %524 = vmatpush1.bf16.msra.mxu0 0
    %525 = vmatprep.subr.bf16.mxu0 0
    %526 = vmatpush1.bf16.msra.mxu0 0
    %527 = vmatprep.subr.bf16.mxu0 0
    %528 = vmatpush1.bf16.msra.mxu0 0
    %529 = vmatprep.subr.bf16.mxu0 0
    %530 = vmatpush1.bf16.msra.mxu0 0
    %531 = vmatprep.subr.bf16.mxu0 0
    %532 = vmatpush1.bf16.msra.mxu0 0
    %533 = vmatprep.mubr.bf16.mxu0 0
    %534 = vmatmul.mubr.bf16.gmra.mrb[0].mxu0 %v85
    %v535 = vpop.f32.mrb[0].mxu0
    %v536 = vadd.f32 %v478, %v535
    %v537 = vpop.f32.mrb[0].mxu0
    %v538 = vpop.f32.mrb[0].mxu0
    %v539 = vadd.f32 %v480, %v538
    %v540 = vpop.f32.mrb[0].mxu0
    %541 = vmatprep.mubr.bf16.mxu0 0
    %542 = vmatmul.mubr.bf16.gmra.mrb[0].mxu0 %v88
    %v543 = vpop.f32.mrb[0].mxu0
    %v544 = vadd.f32 %v482, %v543
    %v545 = vpop.f32.mrb[0].mxu0
    %v546 = vpop.f32.mrb[0].mxu0
    %v547 = vadd.f32 %v484, %v546
    %v548 = vpop.f32.mrb[0].mxu0
    %549 = vmatprep.mubr.bf16.mxu0 0
    %550 = vmatmul.mubr.bf16.gmra.mrb[0].mxu0 %v91
    %v551 = vpop.f32.mrb[0].mxu0
    %v552 = vadd.f32 %v486, %v551
    %v553 = vpop.f32.mrb[0].mxu0
    %v554 = vpop.f32.mrb[0].mxu0
    %v555 = vadd.f32 %v488, %v554
    %v556 = vpop.f32.mrb[0].mxu0
    %557 = vmatprep.mubr.bf16.mxu0 0
    %558 = vmatmul.mubr.bf16.gmra.mrb[0].mxu0 %v94
    %v559 = vpop.f32.mrb[0].mxu0
    %v560 = vadd.f32 %v490, %v559
    %v561 = vpop.f32.mrb[0].mxu0
    %v562 = vpop.f32.mrb[0].mxu0
    %v563 = vadd.f32 %v492, %v562
    %v564 = vpop.f32.mrb[0].mxu0
    %565 = vdwg.mxu0
    %v567 = vlaneseq
    %v568 = vshrl.u32 %v567, 7
    %v569 = vsub.s32 0, %v568
    %v570 = vrot.slane %v359, %v569
    %v572 = vadd.f32 %v536, %v570
    %v573 = vadd.f32 %v539, %v570
    %v574 = vadd.f32 %v544, %v570
    %v575 = vadd.f32 %v547, %v570
    %v576 = vadd.f32 %v552, %v570
    %v577 = vadd.f32 %v555, %v570
    %v578 = vadd.f32 %v560, %v570
    %v579 = vadd.f32 %v563, %v570
    %v580 = vmax.f32 %v572, 0.0
    %v581 = vmax.f32 %v573, 0.0
    %v582 = vmax.f32 %v574, 0.0
    %v583 = vmax.f32 %v575, 0.0
    %v584 = vmax.f32 %v576, 0.0
    %v585 = vmax.f32 %v577, 0.0
    %v586 = vmax.f32 %v578, 0.0
    %v587 = vmax.f32 %v579, 0.0
    %v588 = vld [vmem:[%s7] sm:$0xf]
    %v589 = vld [vmem:[%s7 + $0x4] sm:$0xf]
    %v590 = vld [vmem:[%s7 + $0x8] sm:$0xf]
    %v591 = vld [vmem:[%s7 + $0xc] sm:$0xf]
    %v592 = vld [vmem:[%s7 + $0x10] sm:$0xf]
    %v593 = vld [vmem:[%s7 + $0x14] sm:$0xf]
    %v594 = vld [vmem:[%s8] sm:$0x1]
    %v595 = vpack.c.bf16 %v581, %v580
    %v596 = vpack.c.bf16 %v583, %v582
    %v597 = vpack.c.bf16 %v585, %v584
    %v598 = vpack.c.bf16 %v587, %v586
    %v605 = vunpack.c.l.b16 %v588
    %v606 = vunpack.c.l.b16 %v589
    %v607 = vunpack.c.l.b16 %v590
    %v608 = vunpack.c.l.b16 %v591
    %v609 = vunpack.c.l.b16 %v592
    %v610 = vunpack.c.l.b16 %v593
    %v611 = vpack.c.b16 %v606, %v605
    %v612 = vpack.c.b16 %v608, %v607
    %v613 = vpack.c.b16 %v610, %v609
    %vm617 = vcmask 392192
    %v619 = vsel %vm617, %v595, 0
    %v622 = vsel %vm617, %v596, 0
    %v625 = vsel %vm617, %v597, 0
    %v628 = vsel %vm617, %v598, 0
    %630 = vmatprep.subr.bf16.mxu0 0
    %631 = vmatpush1.bf16.msra.mxu0 %v611
    %632 = vmatprep.subr.bf16.mxu0 0
    %633 = vmatpush1.bf16.msra.mxu0 %v612
    %634 = vmatprep.subr.bf16.mxu0 0
    %635 = vmatpush1.bf16.msra.mxu0 %v613
    %636 = vmatprep.subr.bf16.mxu0 0
    %637 = vmatpush1.bf16.msra.mxu0 0
    %638 = vmatprep.subr.bf16.mxu0 0
    %639 = vmatpush1.bf16.msra.mxu0 0
    %640 = vmatprep.subr.bf16.mxu0 0
    %641 = vmatpush1.bf16.msra.mxu0 0
    %642 = vmatprep.subr.bf16.mxu0 0
    %643 = vmatpush1.bf16.msra.mxu0 0
    %644 = vmatprep.subr.bf16.mxu0 0
    %645 = vmatpush1.bf16.msra.mxu0 0
    %646 = vmatprep.subr.bf16.mxu0 0
    %647 = vmatpush1.bf16.msra.mxu0 0
    %648 = vmatprep.subr.bf16.mxu0 0
    %649 = vmatpush1.bf16.msra.mxu0 0
    %650 = vmatprep.subr.bf16.mxu0 0
    %651 = vmatpush1.bf16.msra.mxu0 0
    %652 = vmatprep.subr.bf16.mxu0 0
    %653 = vmatpush1.bf16.msra.mxu0 0
    %654 = vmatprep.subr.bf16.mxu0 0
    %655 = vmatpush1.bf16.msra.mxu0 0
    %656 = vmatprep.subr.bf16.mxu0 0
    %657 = vmatpush1.bf16.msra.mxu0 0
    %658 = vmatprep.subr.bf16.mxu0 0
    %659 = vmatpush1.bf16.msra.mxu0 0
    %660 = vmatprep.subr.bf16.mxu0 0
    %661 = vmatpush1.bf16.msra.mxu0 0
    %662 = vmatprep.mubr.bf16.mxu0 0
    %663 = vmatmul.mubr.bf16.gmra.mrb[0].mxu0 %v619
    %v664 = vpop.f32.mrb[0].mxu0
    %v665 = vadd.f32 0.0, %v664
    %v666 = vpop.f32.mrb[0].mxu0
    %v667 = vpop.f32.mrb[0].mxu0
    %v668 = vadd.f32 0.0, %v667
    %v669 = vpop.f32.mrb[0].mxu0
    %670 = vmatprep.mubr.bf16.mxu0 0
    %671 = vmatmul.mubr.bf16.gmra.mrb[0].mxu0 %v622
    %v672 = vpop.f32.mrb[0].mxu0
    %v673 = vadd.f32 0.0, %v672
    %v674 = vpop.f32.mrb[0].mxu0
    %v675 = vpop.f32.mrb[0].mxu0
    %v676 = vadd.f32 0.0, %v675
    %v677 = vpop.f32.mrb[0].mxu0
    %678 = vmatprep.mubr.bf16.mxu0 0
    %679 = vmatmul.mubr.bf16.gmra.mrb[0].mxu0 %v625
    %v680 = vpop.f32.mrb[0].mxu0
    %v681 = vadd.f32 0.0, %v680
    %v682 = vpop.f32.mrb[0].mxu0
    %v683 = vpop.f32.mrb[0].mxu0
    %v684 = vadd.f32 0.0, %v683
    %v685 = vpop.f32.mrb[0].mxu0
    %686 = vmatprep.mubr.bf16.mxu0 0
    %687 = vmatmul.mubr.bf16.gmra.mrb[0].mxu0 %v628
    %v688 = vpop.f32.mrb[0].mxu0
    %v689 = vadd.f32 0.0, %v688
    %v690 = vpop.f32.mrb[0].mxu0
    %v691 = vpop.f32.mrb[0].mxu0
    %v692 = vadd.f32 0.0, %v691
    %v693 = vpop.f32.mrb[0].mxu0
    %694 = vdwg.mxu0
    %v695 = vpack.c.bf16 %v668, %v665
    %v696 = vpack.c.bf16 %v676, %v673
    %v697 = vpack.c.bf16 %v684, %v681
    %v698 = vpack.c.bf16 %v692, %v689
    %707 = vrot.lane.b32.xlu0 %v665, 96
    %v708 = vpop.permute.xlu0 %707
    %709 = vrot.lane.b32.xlu0 %v668, 96
    %v710 = vpop.permute.xlu0 %709
    %711 = vrot.lane.b32.xlu0 %v673, 96
    %v712 = vpop.permute.xlu0 %711
    %713 = vrot.lane.b32.xlu0 %v676, 96
    %v714 = vpop.permute.xlu0 %713
    %715 = vrot.lane.b32.xlu0 %v681, 96
    %v716 = vpop.permute.xlu0 %715
    %717 = vrot.lane.b32.xlu0 %v684, 96
    %v718 = vpop.permute.xlu0 %717
    %719 = vrot.lane.b32.xlu0 %v689, 96
    %v720 = vpop.permute.xlu0 %719
    %721 = vrot.lane.b32.xlu0 %v692, 96
    %v722 = vpop.permute.xlu0 %721
    %731 = vmatprep.subr.bf16.mxu0 0
    %732 = vmatpush1.bf16.msra.mxu0 %v695
    %733 = vmatprep.subr.bf16.mxu0 0
    %734 = vmatpush1.bf16.msra.mxu0 %v696
    %735 = vmatprep.subr.bf16.mxu0 0
    %736 = vmatpush1.bf16.msra.mxu0 %v697
    %737 = vmatprep.subr.bf16.mxu0 0
    %738 = vmatpush1.bf16.msra.mxu0 %v698
    %739 = vmatprep.subr.bf16.mxu0 0
    %740 = vmatpush1.bf16.msra.mxu0 0
    %741 = vmatprep.subr.bf16.mxu0 0
    %742 = vmatpush1.bf16.msra.mxu0 0
    %743 = vmatprep.subr.bf16.mxu0 0
    %744 = vmatpush1.bf16.msra.mxu0 0
    %745 = vmatprep.subr.bf16.mxu0 0
    %746 = vmatpush1.bf16.msra.mxu0 0
    %747 = vmatprep.subr.bf16.mxu0 0
    %748 = vmatpush1.bf16.msra.mxu0 0
    %749 = vmatprep.subr.bf16.mxu0 0
    %750 = vmatpush1.bf16.msra.mxu0 0
    %751 = vmatprep.subr.bf16.mxu0 0
    %752 = vmatpush1.bf16.msra.mxu0 0
    %753 = vmatprep.subr.bf16.mxu0 0
    %754 = vmatpush1.bf16.msra.mxu0 0
    %755 = vmatprep.subr.bf16.mxu0 0
    %756 = vmatpush1.bf16.msra.mxu0 0
    %757 = vmatprep.subr.bf16.mxu0 0
    %758 = vmatpush1.bf16.msra.mxu0 0
    %759 = vmatprep.subr.bf16.mxu0 0
    %760 = vmatpush1.bf16.msra.mxu0 0
    %761 = vmatprep.subr.bf16.mxu0 0
    %762 = vmatpush1.bf16.msra.mxu0 0
    %763 = vmatprep.mubr.bf16.mxu0 0
    %764 = vmatmul.mubr.bf16.gmra.mrb[0].mxu0 %v85
    %v765 = vpop.f32.mrb[0].mxu0
    %v766 = vadd.f32 %v708, %v765
    %v767 = vpop.f32.mrb[0].mxu0
    %v768 = vpop.f32.mrb[0].mxu0
    %v769 = vadd.f32 %v710, %v768
    %v770 = vpop.f32.mrb[0].mxu0
    %771 = vmatprep.mubr.bf16.mxu0 0
    %772 = vmatmul.mubr.bf16.gmra.mrb[0].mxu0 %v88
    %v773 = vpop.f32.mrb[0].mxu0
    %v774 = vadd.f32 %v712, %v773
    %v775 = vpop.f32.mrb[0].mxu0
    %v776 = vpop.f32.mrb[0].mxu0
    %v777 = vadd.f32 %v714, %v776
    %v778 = vpop.f32.mrb[0].mxu0
    %779 = vmatprep.mubr.bf16.mxu0 0
    %780 = vmatmul.mubr.bf16.gmra.mrb[0].mxu0 %v91
    %v781 = vpop.f32.mrb[0].mxu0
    %v782 = vadd.f32 %v716, %v781
    %v783 = vpop.f32.mrb[0].mxu0
    %v784 = vpop.f32.mrb[0].mxu0
    %v785 = vadd.f32 %v718, %v784
    %v786 = vpop.f32.mrb[0].mxu0
    %787 = vmatprep.mubr.bf16.mxu0 0
    %788 = vmatmul.mubr.bf16.gmra.mrb[0].mxu0 %v94
    %v789 = vpop.f32.mrb[0].mxu0
    %v790 = vadd.f32 %v720, %v789
    %v791 = vpop.f32.mrb[0].mxu0
    %v792 = vpop.f32.mrb[0].mxu0
    %v793 = vadd.f32 %v722, %v792
    %v794 = vpop.f32.mrb[0].mxu0
    %795 = vdwg.mxu0
    %v797 = vlaneseq
    %v798 = vshrl.u32 %v797, 7
    %v799 = vsub.s32 0, %v798
    %v800 = vrot.slane %v594, %v799
    %v802 = vadd.f32 %v766, %v800
    %v803 = vadd.f32 %v769, %v800
    %v804 = vadd.f32 %v774, %v800
    %v805 = vadd.f32 %v777, %v800
    %v806 = vadd.f32 %v782, %v800
    %v807 = vadd.f32 %v785, %v800
    %v808 = vadd.f32 %v790, %v800
    %v809 = vadd.f32 %v793, %v800
    %v810 = vmax.f32 %v802, 0.0
    %v811 = vmax.f32 %v803, 0.0
    %v812 = vmax.f32 %v804, 0.0
    %v813 = vmax.f32 %v805, 0.0
    %v814 = vmax.f32 %v806, 0.0
    %v815 = vmax.f32 %v807, 0.0
    %v816 = vmax.f32 %v808, 0.0
    %v817 = vmax.f32 %v809, 0.0
    %v818 = vld [vmem:[%s9] sm:$0xf]
    %v819 = vld [vmem:[%s9 + $0x4] sm:$0xf]
    %v820 = vld [vmem:[%s9 + $0x8] sm:$0xf]
    %v821 = vld [vmem:[%s9 + $0xc] sm:$0xf]
    %v822 = vld [vmem:[%s10] sm:$0x1]
    %v823 = vpack.c.bf16 %v811, %v810
    %v824 = vpack.c.bf16 %v813, %v812
    %v825 = vpack.c.bf16 %v815, %v814
    %v826 = vpack.c.bf16 %v817, %v816
    %v831 = vunpack.c.l.b16 %v818
    %v832 = vunpack.c.l.b16 %v819
    %v833 = vunpack.c.l.b16 %v820
    %v834 = vunpack.c.l.b16 %v821
    %v835 = vpack.c.b16 %v832, %v831
    %v836 = vpack.c.b16 %v834, %v833
    %vm839 = vcmask 261120
    %v841 = vsel %vm839, %v823, 0
    %v844 = vsel %vm839, %v824, 0
    %v847 = vsel %vm839, %v825, 0
    %v850 = vsel %vm839, %v826, 0
    %852 = vmatprep.subr.bf16.mxu0 0
    %853 = vmatpush1.bf16.msra.mxu0 %v835
    %854 = vmatprep.subr.bf16.mxu0 0
    %855 = vmatpush1.bf16.msra.mxu0 %v836
    %856 = vmatprep.subr.bf16.mxu0 0
    %857 = vmatpush1.bf16.msra.mxu0 0
    %858 = vmatprep.subr.bf16.mxu0 0
    %859 = vmatpush1.bf16.msra.mxu0 0
    %860 = vmatprep.subr.bf16.mxu0 0
    %861 = vmatpush1.bf16.msra.mxu0 0
    %862 = vmatprep.subr.bf16.mxu0 0
    %863 = vmatpush1.bf16.msra.mxu0 0
    %864 = vmatprep.subr.bf16.mxu0 0
    %865 = vmatpush1.bf16.msra.mxu0 0
    %866 = vmatprep.subr.bf16.mxu0 0
    %867 = vmatpush1.bf16.msra.mxu0 0
    %868 = vmatprep.subr.bf16.mxu0 0
    %869 = vmatpush1.bf16.msra.mxu0 0
    %870 = vmatprep.subr.bf16.mxu0 0
    %871 = vmatpush1.bf16.msra.mxu0 0
    %872 = vmatprep.subr.bf16.mxu0 0
    %873 = vmatpush1.bf16.msra.mxu0 0
    %874 = vmatprep.subr.bf16.mxu0 0
    %875 = vmatpush1.bf16.msra.mxu0 0
    %876 = vmatprep.subr.bf16.mxu0 0
    %877 = vmatpush1.bf16.msra.mxu0 0
    %878 = vmatprep.subr.bf16.mxu0 0
    %879 = vmatpush1.bf16.msra.mxu0 0
    %880 = vmatprep.subr.bf16.mxu0 0
    %881 = vmatpush1.bf16.msra.mxu0 0
    %882 = vmatprep.subr.bf16.mxu0 0
    %883 = vmatpush1.bf16.msra.mxu0 0
    %884 = vmatprep.mubr.bf16.mxu0 0
    %885 = vmatmul.mubr.bf16.gmra.mrb[0].mxu0 %v841
    %v886 = vpop.f32.mrb[0].mxu0
    %v887 = vadd.f32 0.0, %v886
    %v888 = vpop.f32.mrb[0].mxu0
    %v889 = vpop.f32.mrb[0].mxu0
    %v890 = vadd.f32 0.0, %v889
    %v891 = vpop.f32.mrb[0].mxu0
    %892 = vmatprep.mubr.bf16.mxu0 0
    %893 = vmatmul.mubr.bf16.gmra.mrb[0].mxu0 %v844
    %v894 = vpop.f32.mrb[0].mxu0
    %v895 = vadd.f32 0.0, %v894
    %v896 = vpop.f32.mrb[0].mxu0
    %v897 = vpop.f32.mrb[0].mxu0
    %v898 = vadd.f32 0.0, %v897
    %v899 = vpop.f32.mrb[0].mxu0
    %900 = vmatprep.mubr.bf16.mxu0 0
    %901 = vmatmul.mubr.bf16.gmra.mrb[0].mxu0 %v847
    %v902 = vpop.f32.mrb[0].mxu0
    %v903 = vadd.f32 0.0, %v902
    %v904 = vpop.f32.mrb[0].mxu0
    %v905 = vpop.f32.mrb[0].mxu0
    %v906 = vadd.f32 0.0, %v905
    %v907 = vpop.f32.mrb[0].mxu0
    %908 = vmatprep.mubr.bf16.mxu0 0
    %909 = vmatmul.mubr.bf16.gmra.mrb[0].mxu0 %v850
    %v910 = vpop.f32.mrb[0].mxu0
    %v911 = vadd.f32 0.0, %v910
    %v912 = vpop.f32.mrb[0].mxu0
    %v913 = vpop.f32.mrb[0].mxu0
    %v914 = vadd.f32 0.0, %v913
    %v915 = vpop.f32.mrb[0].mxu0
    %916 = vdwg.mxu0
    %v917 = vpack.c.bf16 %v890, %v887
    %v918 = vpack.c.bf16 %v898, %v895
    %v919 = vpack.c.bf16 %v906, %v903
    %v920 = vpack.c.bf16 %v914, %v911
    %929 = vrot.lane.b32.xlu0 %v887, 112
    %v930 = vpop.permute.xlu0 %929
    %931 = vrot.lane.b32.xlu0 %v890, 112
    %v932 = vpop.permute.xlu0 %931
    %933 = vrot.lane.b32.xlu0 %v895, 112
    %v934 = vpop.permute.xlu0 %933
    %935 = vrot.lane.b32.xlu0 %v898, 112
    %v936 = vpop.permute.xlu0 %935
    %937 = vrot.lane.b32.xlu0 %v903, 112
    %v938 = vpop.permute.xlu0 %937
    %939 = vrot.lane.b32.xlu0 %v906, 112
    %v940 = vpop.permute.xlu0 %939
    %941 = vrot.lane.b32.xlu0 %v911, 112
    %v942 = vpop.permute.xlu0 %941
    %943 = vrot.lane.b32.xlu0 %v914, 112
    %v944 = vpop.permute.xlu0 %943
    %953 = vmatprep.subr.bf16.mxu0 0
    %954 = vmatpush1.bf16.msra.mxu0 %v917
    %955 = vmatprep.subr.bf16.mxu0 0
    %956 = vmatpush1.bf16.msra.mxu0 %v918
    %957 = vmatprep.subr.bf16.mxu0 0
    %958 = vmatpush1.bf16.msra.mxu0 %v919
    %959 = vmatprep.subr.bf16.mxu0 0
    %960 = vmatpush1.bf16.msra.mxu0 %v920
    %961 = vmatprep.subr.bf16.mxu0 0
    %962 = vmatpush1.bf16.msra.mxu0 0
    %963 = vmatprep.subr.bf16.mxu0 0
    %964 = vmatpush1.bf16.msra.mxu0 0
    %965 = vmatprep.subr.bf16.mxu0 0
    %966 = vmatpush1.bf16.msra.mxu0 0
    %967 = vmatprep.subr.bf16.mxu0 0
    %968 = vmatpush1.bf16.msra.mxu0 0
    %969 = vmatprep.subr.bf16.mxu0 0
    %970 = vmatpush1.bf16.msra.mxu0 0
    %971 = vmatprep.subr.bf16.mxu0 0
    %972 = vmatpush1.bf16.msra.mxu0 0
    %973 = vmatprep.subr.bf16.mxu0 0
    %974 = vmatpush1.bf16.msra.mxu0 0
    %975 = vmatprep.subr.bf16.mxu0 0
    %976 = vmatpush1.bf16.msra.mxu0 0
    %977 = vmatprep.subr.bf16.mxu0 0
    %978 = vmatpush1.bf16.msra.mxu0 0
    %979 = vmatprep.subr.bf16.mxu0 0
    %980 = vmatpush1.bf16.msra.mxu0 0
    %981 = vmatprep.subr.bf16.mxu0 0
    %982 = vmatpush1.bf16.msra.mxu0 0
    %983 = vmatprep.subr.bf16.mxu0 0
    %984 = vmatpush1.bf16.msra.mxu0 0
    %985 = vmatprep.mubr.bf16.mxu0 0
    %986 = vmatmul.mubr.bf16.gmra.mrb[0].mxu0 %v85
    %v987 = vpop.f32.mrb[0].mxu0
    %v988 = vadd.f32 %v930, %v987
    %v989 = vpop.f32.mrb[0].mxu0
    %v990 = vpop.f32.mrb[0].mxu0
    %v991 = vadd.f32 %v932, %v990
    %v992 = vpop.f32.mrb[0].mxu0
    %993 = vmatprep.mubr.bf16.mxu0 0
    %994 = vmatmul.mubr.bf16.gmra.mrb[0].mxu0 %v88
    %v995 = vpop.f32.mrb[0].mxu0
    %v996 = vadd.f32 %v934, %v995
    %v997 = vpop.f32.mrb[0].mxu0
    %v998 = vpop.f32.mrb[0].mxu0
    %v999 = vadd.f32 %v936, %v998
    %v1000 = vpop.f32.mrb[0].mxu0
    %1001 = vmatprep.mubr.bf16.mxu0 0
    %1002 = vmatmul.mubr.bf16.gmra.mrb[0].mxu0 %v91
    %v1003 = vpop.f32.mrb[0].mxu0
    %v1004 = vadd.f32 %v938, %v1003
    %v1005 = vpop.f32.mrb[0].mxu0
    %v1006 = vpop.f32.mrb[0].mxu0
    %v1007 = vadd.f32 %v940, %v1006
    %v1008 = vpop.f32.mrb[0].mxu0
    %1009 = vmatprep.mubr.bf16.mxu0 0
    %1010 = vmatmul.mubr.bf16.gmra.mrb[0].mxu0 %v94
    %v1011 = vpop.f32.mrb[0].mxu0
    %v1012 = vadd.f32 %v942, %v1011
    %v1013 = vpop.f32.mrb[0].mxu0
    %v1014 = vpop.f32.mrb[0].mxu0
    %v1015 = vadd.f32 %v944, %v1014
    %v1016 = vpop.f32.mrb[0].mxu0
    %1017 = vdwg.mxu0
    %v1019 = vlaneseq
    %v1020 = vshrl.u32 %v1019, 7
    %v1021 = vsub.s32 0, %v1020
    %v1022 = vrot.slane %v822, %v1021
    %v1024 = vadd.f32 %v988, %v1022
    %v1025 = vadd.f32 %v991, %v1022
    %v1026 = vadd.f32 %v996, %v1022
    %v1027 = vadd.f32 %v999, %v1022
    %v1028 = vadd.f32 %v1004, %v1022
    %v1029 = vadd.f32 %v1007, %v1022
    %v1030 = vadd.f32 %v1012, %v1022
    %v1031 = vadd.f32 %v1015, %v1022
    %v1032 = vld [vmem:[%s2] sm:$0xff]
    %v1033 = vld [vmem:[%s2 + $0x8] sm:$0xff]
    %v1034 = vld [vmem:[%s2 + $0x10] sm:$0xff]
    %v1035 = vld [vmem:[%s2 + $0x18] sm:$0xff]
    %v1036 = vld [vmem:[%s2 + $0x20] sm:$0xff]
    %v1037 = vld [vmem:[%s2 + $0x28] sm:$0xff]
    %v1038 = vld [vmem:[%s2 + $0x30] sm:$0xff]
    %v1039 = vld [vmem:[%s2 + $0x38] sm:$0xff]
    %v1040 = vld [vmem:[%s2 + $0x40] sm:$0xff]
    %v1041 = vld [vmem:[%s2 + $0x48] sm:$0xff]
    %v1042 = vld [vmem:[%s2 + $0x50] sm:$0xff]
    %v1043 = vld [vmem:[%s2 + $0x58] sm:$0xff]
    %v1044 = vld [vmem:[%s2 + $0x60] sm:$0xff]
    %v1045 = vld [vmem:[%s2 + $0x68] sm:$0xff]
    %v1046 = vld [vmem:[%s2 + $0x70] sm:$0xff]
    %v1047 = vld [vmem:[%s2 + $0x78] sm:$0xff]
    %v1048 = vld [vmem:[%s2 + $0x80] sm:$0xff]
    %v1049 = vld [vmem:[%s2 + $0x88] sm:$0xff]
    %v1050 = vld [vmem:[%s2 + $0x90] sm:$0xff]
    %v1051 = vld [vmem:[%s2 + $0x98] sm:$0xff]
    %v1052 = vld [vmem:[%s2 + $0xa0] sm:$0xff]
    %v1053 = vld [vmem:[%s2 + $0xa8] sm:$0xff]
    %v1054 = vld [vmem:[%s2 + $0xb0] sm:$0xff]
    %v1055 = vld [vmem:[%s2 + $0xb8] sm:$0xff]
    %v1056 = vld [vmem:[%s2 + $0xc0] sm:$0xff]
    %v1057 = vld [vmem:[%s2 + $0xc8] sm:$0xff]
    %v1058 = vld [vmem:[%s2 + $0xd0] sm:$0xff]
    %v1059 = vld [vmem:[%s2 + $0xd8] sm:$0xff]
    %v1060 = vld [vmem:[%s2 + $0xe0] sm:$0xff]
    %v1061 = vld [vmem:[%s2 + $0xe8] sm:$0xff]
    %v1062 = vld [vmem:[%s2 + $0xf0] sm:$0xff]
    %v1063 = vld [vmem:[%s2 + $0xf8] sm:$0xff]
    %v1064 = vlaneseq
    %v1065 = vand.u32 %v1064, 127
    %1066 = vset.pattern.permute.xlu0 0
    %1067 = vperm.xlu0 %1066, %v1032
    %v1068 = vpop.permute.xlu0 %1067
    %1069 = vset.pattern.permute.xlu0 0
    %1070 = vperm.xlu0 %1069, %v1033
    %v1071 = vpop.permute.xlu0 %1070
    %1072 = vset.pattern.permute.xlu0 0
    %1073 = vperm.xlu0 %1072, %v1034
    %v1074 = vpop.permute.xlu0 %1073
    %1075 = vset.pattern.permute.xlu0 0
    %1076 = vperm.xlu0 %1075, %v1035
    %v1077 = vpop.permute.xlu0 %1076
    %1078 = vset.pattern.permute.xlu0 0
    %1079 = vperm.xlu0 %1078, %v1036
    %v1080 = vpop.permute.xlu0 %1079
    %1081 = vset.pattern.permute.xlu0 0
    %1082 = vperm.xlu0 %1081, %v1037
    %v1083 = vpop.permute.xlu0 %1082
    %1084 = vset.pattern.permute.xlu0 0
    %1085 = vperm.xlu0 %1084, %v1038
    %v1086 = vpop.permute.xlu0 %1085
    %1087 = vset.pattern.permute.xlu0 0
    %1088 = vperm.xlu0 %1087, %v1039
    %v1089 = vpop.permute.xlu0 %1088
    %1090 = vset.pattern.permute.xlu0 0
    %1091 = vperm.xlu0 %1090, %v1040
    %v1092 = vpop.permute.xlu0 %1091
    %1093 = vset.pattern.permute.xlu0 0
    %1094 = vperm.xlu0 %1093, %v1041
    %v1095 = vpop.permute.xlu0 %1094
    %1096 = vset.pattern.permute.xlu0 0
    %1097 = vperm.xlu0 %1096, %v1042
    %v1098 = vpop.permute.xlu0 %1097
    %1099 = vset.pattern.permute.xlu0 0
    %1100 = vperm.xlu0 %1099, %v1043
    %v1101 = vpop.permute.xlu0 %1100
    %1102 = vset.pattern.permute.xlu0 0
    %1103 = vperm.xlu0 %1102, %v1044
    %v1104 = vpop.permute.xlu0 %1103
    %1105 = vset.pattern.permute.xlu0 0
    %1106 = vperm.xlu0 %1105, %v1045
    %v1107 = vpop.permute.xlu0 %1106
    %1108 = vset.pattern.permute.xlu0 0
    %1109 = vperm.xlu0 %1108, %v1046
    %v1110 = vpop.permute.xlu0 %1109
    %1111 = vset.pattern.permute.xlu0 0
    %1112 = vperm.xlu0 %1111, %v1047
    %v1113 = vpop.permute.xlu0 %1112
    %1114 = vset.pattern.permute.xlu0 0
    %1115 = vperm.xlu0 %1114, %v1048
    %v1116 = vpop.permute.xlu0 %1115
    %1117 = vset.pattern.permute.xlu0 0
    %1118 = vperm.xlu0 %1117, %v1049
    %v1119 = vpop.permute.xlu0 %1118
    %1120 = vset.pattern.permute.xlu0 0
    %1121 = vperm.xlu0 %1120, %v1050
    %v1122 = vpop.permute.xlu0 %1121
    %1123 = vset.pattern.permute.xlu0 0
    %1124 = vperm.xlu0 %1123, %v1051
    %v1125 = vpop.permute.xlu0 %1124
    %1126 = vset.pattern.permute.xlu0 0
    %1127 = vperm.xlu0 %1126, %v1052
    %v1128 = vpop.permute.xlu0 %1127
    %1129 = vset.pattern.permute.xlu0 0
    %1130 = vperm.xlu0 %1129, %v1053
    %v1131 = vpop.permute.xlu0 %1130
    %1132 = vset.pattern.permute.xlu0 0
    %1133 = vperm.xlu0 %1132, %v1054
    %v1134 = vpop.permute.xlu0 %1133
    %1135 = vset.pattern.permute.xlu0 0
    %1136 = vperm.xlu0 %1135, %v1055
    %v1137 = vpop.permute.xlu0 %1136
    %1138 = vset.pattern.permute.xlu0 0
    %1139 = vperm.xlu0 %1138, %v1056
    %v1140 = vpop.permute.xlu0 %1139
    %1141 = vset.pattern.permute.xlu0 0
    %1142 = vperm.xlu0 %1141, %v1057
    %v1143 = vpop.permute.xlu0 %1142
    %1144 = vset.pattern.permute.xlu0 0
    %1145 = vperm.xlu0 %1144, %v1058
    %v1146 = vpop.permute.xlu0 %1145
    %1147 = vset.pattern.permute.xlu0 0
    %1148 = vperm.xlu0 %1147, %v1059
    %v1149 = vpop.permute.xlu0 %1148
    %1150 = vset.pattern.permute.xlu0 0
    %1151 = vperm.xlu0 %1150, %v1060
    %v1152 = vpop.permute.xlu0 %1151
    %1153 = vset.pattern.permute.xlu0 0
    %1154 = vperm.xlu0 %1153, %v1061
    %v1155 = vpop.permute.xlu0 %1154
    %1156 = vset.pattern.permute.xlu0 0
    %1157 = vperm.xlu0 %1156, %v1062
    %v1158 = vpop.permute.xlu0 %1157
    %1159 = vset.pattern.permute.xlu0 0
    %1160 = vperm.xlu0 %1159, %v1063
    %v1161 = vpop.permute.xlu0 %1160
    %vm1162 = vcmp.eq.s32.totalorder %v1065, %v1068
    %vm1163 = vcmp.eq.s32.totalorder %v1065, %v1071
    %vm1164 = vcmp.eq.s32.totalorder %v1065, %v1074
    %vm1165 = vcmp.eq.s32.totalorder %v1065, %v1077
    %vm1166 = vcmp.eq.s32.totalorder %v1065, %v1080
    %vm1167 = vcmp.eq.s32.totalorder %v1065, %v1083
    %vm1168 = vcmp.eq.s32.totalorder %v1065, %v1086
    %vm1169 = vcmp.eq.s32.totalorder %v1065, %v1089
    %vm1170 = vcmp.eq.s32.totalorder %v1065, %v1092
    %vm1171 = vcmp.eq.s32.totalorder %v1065, %v1095
    %vm1172 = vcmp.eq.s32.totalorder %v1065, %v1098
    %vm1173 = vcmp.eq.s32.totalorder %v1065, %v1101
    %vm1174 = vcmp.eq.s32.totalorder %v1065, %v1104
    %vm1175 = vcmp.eq.s32.totalorder %v1065, %v1107
    %vm1176 = vcmp.eq.s32.totalorder %v1065, %v1110
    %vm1177 = vcmp.eq.s32.totalorder %v1065, %v1113
    %vm1178 = vcmp.eq.s32.totalorder %v1065, %v1116
    %vm1179 = vcmp.eq.s32.totalorder %v1065, %v1119
    %vm1180 = vcmp.eq.s32.totalorder %v1065, %v1122
    %vm1181 = vcmp.eq.s32.totalorder %v1065, %v1125
    %vm1182 = vcmp.eq.s32.totalorder %v1065, %v1128
    %vm1183 = vcmp.eq.s32.totalorder %v1065, %v1131
    %vm1184 = vcmp.eq.s32.totalorder %v1065, %v1134
    %vm1185 = vcmp.eq.s32.totalorder %v1065, %v1137
    %vm1186 = vcmp.eq.s32.totalorder %v1065, %v1140
    %vm1187 = vcmp.eq.s32.totalorder %v1065, %v1143
    %vm1188 = vcmp.eq.s32.totalorder %v1065, %v1146
    %vm1189 = vcmp.eq.s32.totalorder %v1065, %v1149
    %vm1190 = vcmp.eq.s32.totalorder %v1065, %v1152
    %vm1191 = vcmp.eq.s32.totalorder %v1065, %v1155
    %vm1192 = vcmp.eq.s32.totalorder %v1065, %v1158
    %vm1193 = vcmp.eq.s32.totalorder %v1065, %v1161
    %v1194 = vsel %vm1162, 1, 0
    %v1195 = vsel %vm1163, 1, 0
    %v1196 = vsel %vm1164, 1, 0
    %v1197 = vsel %vm1165, 1, 0
    %v1198 = vsel %vm1166, 1, 0
    %v1199 = vsel %vm1167, 1, 0
    %v1200 = vsel %vm1168, 1, 0
    %v1201 = vsel %vm1169, 1, 0
    %v1202 = vsel %vm1170, 1, 0
    %v1203 = vsel %vm1171, 1, 0
    %v1204 = vsel %vm1172, 1, 0
    %v1205 = vsel %vm1173, 1, 0
    %v1206 = vsel %vm1174, 1, 0
    %v1207 = vsel %vm1175, 1, 0
    %v1208 = vsel %vm1176, 1, 0
    %v1209 = vsel %vm1177, 1, 0
    %v1210 = vsel %vm1178, 1, 0
    %v1211 = vsel %vm1179, 1, 0
    %v1212 = vsel %vm1180, 1, 0
    %v1213 = vsel %vm1181, 1, 0
    %v1214 = vsel %vm1182, 1, 0
    %v1215 = vsel %vm1183, 1, 0
    %v1216 = vsel %vm1184, 1, 0
    %v1217 = vsel %vm1185, 1, 0
    %v1218 = vsel %vm1186, 1, 0
    %v1219 = vsel %vm1187, 1, 0
    %v1220 = vsel %vm1188, 1, 0
    %v1221 = vsel %vm1189, 1, 0
    %v1222 = vsel %vm1190, 1, 0
    %v1223 = vsel %vm1191, 1, 0
    %v1224 = vsel %vm1192, 1, 0
    %v1225 = vsel %vm1193, 1, 0
    %v1226 = vcvt.s32.f32 %v1194
    %v1227 = vcvt.s32.f32 %v1195
    %v1228 = vcvt.s32.f32 %v1196
    %v1229 = vcvt.s32.f32 %v1197
    %v1230 = vcvt.s32.f32 %v1198
    %v1231 = vcvt.s32.f32 %v1199
    %v1232 = vcvt.s32.f32 %v1200
    %v1233 = vcvt.s32.f32 %v1201
    %v1234 = vcvt.s32.f32 %v1202
    %v1235 = vcvt.s32.f32 %v1203
    %v1236 = vcvt.s32.f32 %v1204
    %v1237 = vcvt.s32.f32 %v1205
    %v1238 = vcvt.s32.f32 %v1206
    %v1239 = vcvt.s32.f32 %v1207
    %v1240 = vcvt.s32.f32 %v1208
    %v1241 = vcvt.s32.f32 %v1209
    %v1242 = vcvt.s32.f32 %v1210
    %v1243 = vcvt.s32.f32 %v1211
    %v1244 = vcvt.s32.f32 %v1212
    %v1245 = vcvt.s32.f32 %v1213
    %v1246 = vcvt.s32.f32 %v1214
    %v1247 = vcvt.s32.f32 %v1215
    %v1248 = vcvt.s32.f32 %v1216
    %v1249 = vcvt.s32.f32 %v1217
    %v1250 = vcvt.s32.f32 %v1218
    %v1251 = vcvt.s32.f32 %v1219
    %v1252 = vcvt.s32.f32 %v1220
    %v1253 = vcvt.s32.f32 %v1221
    %v1254 = vcvt.s32.f32 %v1222
    %v1255 = vcvt.s32.f32 %v1223
    %v1256 = vcvt.s32.f32 %v1224
    %v1257 = vcvt.s32.f32 %v1225
    %v1258 = vpack.c.bf16 %v1227, %v1226
    %v1259 = vpack.c.bf16 %v1229, %v1228
    %v1260 = vpack.c.bf16 %v1231, %v1230
    %v1261 = vpack.c.bf16 %v1233, %v1232
    %v1262 = vpack.c.bf16 %v1235, %v1234
    %v1263 = vpack.c.bf16 %v1237, %v1236
    %v1264 = vpack.c.bf16 %v1239, %v1238
    %v1265 = vpack.c.bf16 %v1241, %v1240
    %v1266 = vpack.c.bf16 %v1243, %v1242
    %v1267 = vpack.c.bf16 %v1245, %v1244
    %v1268 = vpack.c.bf16 %v1247, %v1246
    %v1269 = vpack.c.bf16 %v1249, %v1248
    %v1270 = vpack.c.bf16 %v1251, %v1250
    %v1271 = vpack.c.bf16 %v1253, %v1252
    %v1272 = vpack.c.bf16 %v1255, %v1254
    %v1273 = vpack.c.bf16 %v1257, %v1256
    %v1274 = vpack.c.bf16 %v1025, %v1024
    %v1275 = vpack.c.bf16 %v1027, %v1026
    %v1276 = vpack.c.bf16 %v1029, %v1028
    %v1277 = vpack.c.bf16 %v1031, %v1030
    %v1279 = vsel %vm83, %v1258, 0
    %v1282 = vsel %vm83, %v1259, 0
    %v1285 = vsel %vm83, %v1260, 0
    %v1288 = vsel %vm83, %v1261, 0
    %v1291 = vsel %vm83, %v1262, 0
    %v1294 = vsel %vm83, %v1263, 0
    %v1297 = vsel %vm83, %v1264, 0
    %v1300 = vsel %vm83, %v1265, 0
    %v1303 = vsel %vm83, %v1266, 0
    %v1306 = vsel %vm83, %v1267, 0
    %v1309 = vsel %vm83, %v1268, 0
    %v1312 = vsel %vm83, %v1269, 0
    %v1315 = vsel %vm83, %v1270, 0
    %v1318 = vsel %vm83, %v1271, 0
    %v1321 = vsel %vm83, %v1272, 0
    %v1324 = vsel %vm83, %v1273, 0
    %1326 = vmatprep.subr.bf16.mxu0 0
    %1327 = vmatpush1.bf16.msra.mxu0 %v1274
    %1328 = vmatprep.subr.bf16.mxu0 0
    %1329 = vmatpush1.bf16.msra.mxu0 %v1275
    %1330 = vmatprep.subr.bf16.mxu0 0
    %1331 = vmatpush1.bf16.msra.mxu0 %v1276
    %1332 = vmatprep.subr.bf16.mxu0 0
    %1333 = vmatpush1.bf16.msra.mxu0 %v1277
    %1334 = vmatprep.subr.bf16.mxu0 0
    %1335 = vmatpush1.bf16.msra.mxu0 0
    %1336 = vmatprep.subr.bf16.mxu0 0
    %1337 = vmatpush1.bf16.msra.mxu0 0
    %1338 = vmatprep.subr.bf16.mxu0 0
    %1339 = vmatpush1.bf16.msra.mxu0 0
    %1340 = vmatprep.subr.bf16.mxu0 0
    %1341 = vmatpush1.bf16.msra.mxu0 0
    %1342 = vmatprep.subr.bf16.mxu0 0
    %1343 = vmatpush1.bf16.msra.mxu0 0
    %1344 = vmatprep.subr.bf16.mxu0 0
    %1345 = vmatpush1.bf16.msra.mxu0 0
    %1346 = vmatprep.subr.bf16.mxu0 0
    %1347 = vmatpush1.bf16.msra.mxu0 0
    %1348 = vmatprep.subr.bf16.mxu0 0
    %1349 = vmatpush1.bf16.msra.mxu0 0
    %1350 = vmatprep.subr.bf16.mxu0 0
    %1351 = vmatpush1.bf16.msra.mxu0 0
    %1352 = vmatprep.subr.bf16.mxu0 0
    %1353 = vmatpush1.bf16.msra.mxu0 0
    %1354 = vmatprep.subr.bf16.mxu0 0
    %1355 = vmatpush1.bf16.msra.mxu0 0
    %1356 = vmatprep.subr.bf16.mxu0 0
    %1357 = vmatpush1.bf16.msra.mxu0 0
    %1358 = vmatprep.mubr.bf16.mxu0 0
    %1359 = vmatmul.mubr.bf16.gmra.mrb[0].mxu0 %v1279
    %v1360 = vpop.f32.mrb[0].mxu0
    %v1361 = vadd.f32 0.0, %v1360
    %v1362 = vpop.f32.mrb[0].mxu0
    %v1363 = vpop.f32.mrb[0].mxu0
    %v1364 = vadd.f32 0.0, %v1363
    %v1365 = vpop.f32.mrb[0].mxu0
    %1366 = vmatprep.mubr.bf16.mxu0 0
    %1367 = vmatmul.mubr.bf16.gmra.mrb[0].mxu0 %v1282
    %v1368 = vpop.f32.mrb[0].mxu0
    %v1369 = vadd.f32 0.0, %v1368
    %v1370 = vpop.f32.mrb[0].mxu0
    %v1371 = vpop.f32.mrb[0].mxu0
    %v1372 = vadd.f32 0.0, %v1371
    %v1373 = vpop.f32.mrb[0].mxu0
    %1374 = vmatprep.mubr.bf16.mxu0 0
    %1375 = vmatmul.mubr.bf16.gmra.mrb[0].mxu0 %v1285
    %v1376 = vpop.f32.mrb[0].mxu0
    %v1377 = vadd.f32 0.0, %v1376
    %v1378 = vpop.f32.mrb[0].mxu0
    %v1379 = vpop.f32.mrb[0].mxu0
    %v1380 = vadd.f32 0.0, %v1379
    %v1381 = vpop.f32.mrb[0].mxu0
    %1382 = vmatprep.mubr.bf16.mxu0 0
    %1383 = vmatmul.mubr.bf16.gmra.mrb[0].mxu0 %v1288
    %v1384 = vpop.f32.mrb[0].mxu0
    %v1385 = vadd.f32 0.0, %v1384
    %v1386 = vpop.f32.mrb[0].mxu0
    %v1387 = vpop.f32.mrb[0].mxu0
    %v1388 = vadd.f32 0.0, %v1387
    %v1389 = vpop.f32.mrb[0].mxu0
    %1390 = vmatprep.mubr.bf16.mxu0 0
    %1391 = vmatmul.mubr.bf16.gmra.mrb[0].mxu0 %v1291
    %v1392 = vpop.f32.mrb[0].mxu0
    %v1393 = vadd.f32 0.0, %v1392
    %v1394 = vpop.f32.mrb[0].mxu0
    %v1395 = vpop.f32.mrb[0].mxu0
    %v1396 = vadd.f32 0.0, %v1395
    %v1397 = vpop.f32.mrb[0].mxu0
    %1398 = vmatprep.mubr.bf16.mxu0 0
    %1399 = vmatmul.mubr.bf16.gmra.mrb[0].mxu0 %v1294
    %v1400 = vpop.f32.mrb[0].mxu0
    %v1401 = vadd.f32 0.0, %v1400
    %v1402 = vpop.f32.mrb[0].mxu0
    %v1403 = vpop.f32.mrb[0].mxu0
    %v1404 = vadd.f32 0.0, %v1403
    %v1405 = vpop.f32.mrb[0].mxu0
    %1406 = vmatprep.mubr.bf16.mxu0 0
    %1407 = vmatmul.mubr.bf16.gmra.mrb[0].mxu0 %v1297
    %v1408 = vpop.f32.mrb[0].mxu0
    %v1409 = vadd.f32 0.0, %v1408
    %v1410 = vpop.f32.mrb[0].mxu0
    %v1411 = vpop.f32.mrb[0].mxu0
    %v1412 = vadd.f32 0.0, %v1411
    %v1413 = vpop.f32.mrb[0].mxu0
    %1414 = vmatprep.mubr.bf16.mxu0 0
    %1415 = vmatmul.mubr.bf16.gmra.mrb[0].mxu0 %v1300
    %v1416 = vpop.f32.mrb[0].mxu0
    %v1417 = vadd.f32 0.0, %v1416
    %v1418 = vpop.f32.mrb[0].mxu0
    %v1419 = vpop.f32.mrb[0].mxu0
    %v1420 = vadd.f32 0.0, %v1419
    %v1421 = vpop.f32.mrb[0].mxu0
    %1422 = vmatprep.mubr.bf16.mxu0 0
    %1423 = vmatmul.mubr.bf16.gmra.mrb[0].mxu0 %v1303
    %v1424 = vpop.f32.mrb[0].mxu0
    %v1425 = vadd.f32 0.0, %v1424
    %v1426 = vpop.f32.mrb[0].mxu0
    %v1427 = vpop.f32.mrb[0].mxu0
    %v1428 = vadd.f32 0.0, %v1427
    %v1429 = vpop.f32.mrb[0].mxu0
    %1430 = vmatprep.mubr.bf16.mxu0 0
    %1431 = vmatmul.mubr.bf16.gmra.mrb[0].mxu0 %v1306
    %v1432 = vpop.f32.mrb[0].mxu0
    %v1433 = vadd.f32 0.0, %v1432
    %v1434 = vpop.f32.mrb[0].mxu0
    %v1435 = vpop.f32.mrb[0].mxu0
    %v1436 = vadd.f32 0.0, %v1435
    %v1437 = vpop.f32.mrb[0].mxu0
    %1438 = vmatprep.mubr.bf16.mxu0 0
    %1439 = vmatmul.mubr.bf16.gmra.mrb[0].mxu0 %v1309
    %v1440 = vpop.f32.mrb[0].mxu0
    %v1441 = vadd.f32 0.0, %v1440
    %v1442 = vpop.f32.mrb[0].mxu0
    %v1443 = vpop.f32.mrb[0].mxu0
    %v1444 = vadd.f32 0.0, %v1443
    %v1445 = vpop.f32.mrb[0].mxu0
    %1446 = vmatprep.mubr.bf16.mxu0 0
    %1447 = vmatmul.mubr.bf16.gmra.mrb[0].mxu0 %v1312
    %v1448 = vpop.f32.mrb[0].mxu0
    %v1449 = vadd.f32 0.0, %v1448
    %v1450 = vpop.f32.mrb[0].mxu0
    %v1451 = vpop.f32.mrb[0].mxu0
    %v1452 = vadd.f32 0.0, %v1451
    %v1453 = vpop.f32.mrb[0].mxu0
    %1454 = vmatprep.mubr.bf16.mxu0 0
    %1455 = vmatmul.mubr.bf16.gmra.mrb[0].mxu0 %v1315
    %v1456 = vpop.f32.mrb[0].mxu0
    %v1457 = vadd.f32 0.0, %v1456
    %v1458 = vpop.f32.mrb[0].mxu0
    %v1459 = vpop.f32.mrb[0].mxu0
    %v1460 = vadd.f32 0.0, %v1459
    %v1461 = vpop.f32.mrb[0].mxu0
    %1462 = vmatprep.mubr.bf16.mxu0 0
    %1463 = vmatmul.mubr.bf16.gmra.mrb[0].mxu0 %v1318
    %v1464 = vpop.f32.mrb[0].mxu0
    %v1465 = vadd.f32 0.0, %v1464
    %v1466 = vpop.f32.mrb[0].mxu0
    %v1467 = vpop.f32.mrb[0].mxu0
    %v1468 = vadd.f32 0.0, %v1467
    %v1469 = vpop.f32.mrb[0].mxu0
    %1470 = vmatprep.mubr.bf16.mxu0 0
    %1471 = vmatmul.mubr.bf16.gmra.mrb[0].mxu0 %v1321
    %v1472 = vpop.f32.mrb[0].mxu0
    %v1473 = vadd.f32 0.0, %v1472
    %v1474 = vpop.f32.mrb[0].mxu0
    %v1475 = vpop.f32.mrb[0].mxu0
    %v1476 = vadd.f32 0.0, %v1475
    %v1477 = vpop.f32.mrb[0].mxu0
    %1478 = vmatprep.mubr.bf16.mxu0 0
    %1479 = vmatmul.mubr.bf16.gmra.mrb[0].mxu0 %v1324
    %v1480 = vpop.f32.mrb[0].mxu0
    %v1481 = vadd.f32 0.0, %v1480
    %v1482 = vpop.f32.mrb[0].mxu0
    %v1483 = vpop.f32.mrb[0].mxu0
    %v1484 = vadd.f32 0.0, %v1483
    %v1485 = vpop.f32.mrb[0].mxu0
    %1486 = vdwg.mxu0
    %v1487 = vmul.f32 %v1361, %v1425
    %v1488 = vmul.f32 %v1364, %v1428
    %v1489 = vmul.f32 %v1369, %v1433
    %v1490 = vmul.f32 %v1372, %v1436
    %v1491 = vmul.f32 %v1377, %v1441
    %v1492 = vmul.f32 %v1380, %v1444
    %v1493 = vmul.f32 %v1385, %v1449
    %v1494 = vmul.f32 %v1388, %v1452
    %v1495 = vmul.f32 %v1393, %v1457
    %v1496 = vmul.f32 %v1396, %v1460
    %v1497 = vmul.f32 %v1401, %v1465
    %v1498 = vmul.f32 %v1404, %v1468
    %v1499 = vmul.f32 %v1409, %v1473
    %v1500 = vmul.f32 %v1412, %v1476
    %v1501 = vmul.f32 %v1417, %v1481
    %v1502 = vmul.f32 %v1420, %v1484
    %v1504 = vsel %vm173, 1.0, 0
    %v1507 = vsel %vm173, %v1487, 0
    %v1510 = vsel %vm173, %v1488, 0
    %v1513 = vsel %vm173, %v1489, 0
    %v1516 = vsel %vm173, %v1490, 0
    %v1519 = vsel %vm173, %v1491, 0
    %v1522 = vsel %vm173, %v1492, 0
    %v1525 = vsel %vm173, %v1493, 0
    %v1528 = vsel %vm173, %v1494, 0
    %v1531 = vsel %vm173, %v1495, 0
    %v1534 = vsel %vm173, %v1496, 0
    %v1537 = vsel %vm173, %v1497, 0
    %v1540 = vsel %vm173, %v1498, 0
    %v1543 = vsel %vm173, %v1499, 0
    %v1546 = vsel %vm173, %v1500, 0
    %v1549 = vsel %vm173, %v1501, 0
    %v1552 = vsel %vm173, %v1502, 0
    %1554 = vmatprep.subr.mxu0 0.0
    %1555 = vmatpush1.xpose.msra.mxu0 %v1507
    %1556 = vmatprep.subr.mxu0 0.0
    %1557 = vmatpush1.xpose.msra.mxu0 %v1510
    %1558 = vmatprep.subr.mxu0 0.0
    %1559 = vmatpush1.xpose.msra.mxu0 %v1513
    %1560 = vmatprep.subr.mxu0 0.0
    %1561 = vmatpush1.xpose.msra.mxu0 %v1516
    %1562 = vmatprep.subr.mxu0 0.0
    %1563 = vmatpush1.xpose.msra.mxu0 %v1519
    %1564 = vmatprep.subr.mxu0 0.0
    %1565 = vmatpush1.xpose.msra.mxu0 %v1522
    %1566 = vmatprep.subr.mxu0 0.0
    %1567 = vmatpush1.xpose.msra.mxu0 %v1525
    %1568 = vmatprep.subr.mxu0 0.0
    %1569 = vmatpush1.xpose.msra.mxu0 %v1528
    %1570 = vmatprep.subr.mxu0 0.0
    %1571 = vmatpush1.xpose.msra.mxu0 %v1531
    %1572 = vmatprep.subr.mxu0 0.0
    %1573 = vmatpush1.xpose.msra.mxu0 %v1534
    %1574 = vmatprep.subr.mxu0 0.0
    %1575 = vmatpush1.xpose.msra.mxu0 %v1537
    %1576 = vmatprep.subr.mxu0 0.0
    %1577 = vmatpush1.xpose.msra.mxu0 %v1540
    %1578 = vmatprep.subr.mxu0 0.0
    %1579 = vmatpush1.xpose.msra.mxu0 %v1543
    %1580 = vmatprep.subr.mxu0 0.0
    %1581 = vmatpush1.xpose.msra.mxu0 %v1546
    %1582 = vmatprep.subr.mxu0 0.0
    %1583 = vmatpush1.xpose.msra.mxu0 %v1549
    %1584 = vmatprep.subr.mxu0 0.0
    %1585 = vmatpush1.xpose.msra.mxu0 %v1552
    %1586 = vmatprep.subr.mxu0 0.0
    %1587 = vmatpush1.xpose.msra.mxu0 0.0
    %1588 = vmatprep.subr.mxu0 0.0
    %1589 = vmatpush1.xpose.msra.mxu0 0.0
    %1590 = vmatprep.subr.mxu0 0.0
    %1591 = vmatpush1.xpose.msra.mxu0 0.0
    %1592 = vmatprep.subr.mxu0 0.0
    %1593 = vmatpush1.xpose.msra.mxu0 0.0
    %1594 = vmatprep.subr.mxu0 0.0
    %1595 = vmatpush1.xpose.msra.mxu0 0.0
    %1596 = vmatprep.subr.mxu0 0.0
    %1597 = vmatpush1.xpose.msra.mxu0 0.0
    %1598 = vmatprep.subr.mxu0 0.0
    %1599 = vmatpush1.xpose.msra.mxu0 0.0
    %1600 = vmatprep.subr.mxu0 0.0
    %1601 = vmatpush1.xpose.msra.mxu0 0.0
    %1602 = vmatprep.subr.mxu0 0.0
    %1603 = vmatpush1.xpose.msra.mxu0 0.0
    %1604 = vmatprep.subr.mxu0 0.0
    %1605 = vmatpush1.xpose.msra.mxu0 0.0
    %1606 = vmatprep.subr.mxu0 0.0
    %1607 = vmatpush1.xpose.msra.mxu0 0.0
    %1608 = vmatprep.subr.mxu0 0.0
    %1609 = vmatpush1.xpose.msra.mxu0 0.0
    %1610 = vmatprep.subr.mxu0 0.0
    %1611 = vmatpush1.xpose.msra.mxu0 0.0
    %1612 = vmatprep.subr.mxu0 0.0
    %1613 = vmatpush1.xpose.msra.mxu0 0.0
    %1614 = vmatprep.subr.mxu0 0.0
    %1615 = vmatpush1.xpose.msra.mxu0 0.0
    %1616 = vmatprep.subr.mxu0 0.0
    %1617 = vmatpush1.xpose.msra.mxu0 0.0
    %1618 = vmatprep.mubr.f32.mxu0 0.0
    %1619 = vmatmul.mubr.f32.gmra.mrb[0].mxu0 %v1504
    %v1620 = vpop.f32.mrb[0].mxu0
    %v1621 = vadd.f32 0.0, %v1620
    %v1622 = vpop.f32.mrb[0].mxu0
    %1623 = vdwg.mxu0
    %1624 = vst [vmem:[#allocation2] sm:$0xff] %v1621
    // Predicated region
    $region46: #{tpu_custom_call.1} parent=1 // pred_check
      _
    $region47: #{tpu_custom_call.1} parent=1 // pred_check_branch
      %1626 = sbr.rel (0) target = $region49
    $region48: #{tpu_custom_call.1} parent=1 // pred_region
      %s1628 = ssub.s32 128, 128
      %1629 = vsyncadd [#allocation3], %s1628
      %s1631 = sshll.u32 [#allocation2], 4
      %s1632 = int_to_ptr.vmem [resolvable:$true] %s1631
      %1634 = dma.vmem_to_hbm [thread:$0]  %s1632, 128, %s11, [#allocation3]
    $region49: #{tpu_custom_call.1} parent=1 // pred_fallthru
      _
    // Predicated region
    $region50: #{tpu_custom_call.1} parent=1 // pred_check
      _
    $region51: #{tpu_custom_call.1} parent=1 // pred_check_branch
      %1636 = sbr.rel (0) target = $region53
    $region52: #{tpu_custom_call.1} parent=1 // pred_region
      %1637 = dma.done [#allocation3], 128
    $region53: #{tpu_custom_call.1} parent=1 // pred_fallthru
      _
    %1638 = vsyncpa [#allocation3], 1

</llo_original>
